<compile_context>
chip_gen: v6e
topology: v6e:2x2x1
jax: 0.10.0
libtpu: 0.0.40
codegen_flags: <defaults>
</compile_context>

<pallas_src>
import functools

import jax
import jax.numpy as jnp
from jax.experimental import pallas as pl
from jax.experimental.pallas import tpu as pltpu

ESM_DIM = 640      # esm2_t30_150M embedding size
HID_DIM = 512      # self.lin output size
_NEG = -1e30       # softmax mask value (BOS token + alignment padding rows)
_MAX_B_BLK = 32    # P is (b_blk, b_blk*L_pad): keep its quadratic exp/VMEM cost bounded


def _protein_attn_kernel(x_ref, wl_ref, v_ref, b_ref, out_ref,
                         *, b_blk, l_pad, l_tot, matmul_dtype):
    """One block of b_blk sequences per grid step (M = b_blk * l_pad rows).

    x_ref  : (M, 640)          token reps (BOS + pad rows included, masked below)
    wl_ref : (640, 512)        lin weight transposed to (in, out), matmul_dtype
    v_ref  : (1, 640)          folded attention projection att_w @ lin_w
    b_ref  : (1, 512)          lin bias (f32, added after pooling)
    out_ref: (1, b_blk, 512)   pooled protein vectors (f32)
    """
    m_rows = b_blk * l_pad
    # In-kernel cast: HBM traffic stays at the source dtype, MXU sees matmul_dtype.
    x = x_ref[...].astype(matmul_dtype)

    # Hidden features for every row: one big MXU matmul, f32 accumulation.
    h = jnp.dot(x, wl_ref[...], preferred_element_type=jnp.float32)       # (M, 512)

    # Raw attention scores in lane-major orientation via A.B^T on the MXU.
    # (The attention bias is constant along the softmax axis -> cancels.)
    s_row = jax.lax.dot_general(
        v_ref[...], x, (((1,), (1,)), ((), ())),
        preferred_element_type=jnp.float32)                               # (1, M)

    # Segment-masked score matrix: row b only sees its own sequence, minus the
    # BOS token (position 0) and the alignment padding (positions >= l_tot).
    row = jax.lax.broadcasted_iota(jnp.int32, (b_blk, m_rows), 0)
    col = jax.lax.broadcasted_iota(jnp.int32, (b_blk, m_rows), 1)
    lo = row * l_pad
    mask = (col >= lo + 1) & (col < lo + l_tot)
    s = jnp.where(mask, s_row, _NEG)                                      # (b_blk, M)

    # Per-sequence softmax == row-wise softmax of s (plain lane reductions).
    m_b = jnp.max(s, axis=-1, keepdims=True)                              # (b_blk, 1)
    e = jnp.exp(s - m_b)                                                  # masked cols -> 0
    denom = jnp.sum(e, axis=-1, keepdims=True)
    # approx reciprocal: EUP slot, ~1e-4 relative error on the normalization;
    # switch to e / denom if a numerically sensitive head consumes this.
    p = e * pl.reciprocal(denom, approx=True)                             # (b_blk, M)

    # Weighted pooling as a single MXU matmul.  The lin bias pools to exactly
    # itself because the softmax weights sum to 1, so it is added once here.
    pooled = jnp.dot(p, h, preferred_element_type=jnp.float32)            # (b_blk, 512)
    out_ref[0] = (pooled + b_ref[...]).astype(out_ref.dtype)


def _vmem_capacity_bytes():
    try:
        return int(pltpu.get_tpu_info().vmem_capacity_bytes)
    except Exception:
        return 64 * 1024 * 1024        # v7x per-core capacity: safe lower bound


def _block_vmem_bytes(b_blk, l_pad, x_itemsize):
    rows = b_blk * l_pad
    x_slab = 2 * rows * ESM_DIM * x_itemsize      # double-buffered activation block
    hidden = rows * HID_DIM * 4                   # f32 hidden features
    smax = 3 * b_blk * rows * 4                   # score / exp / softmax-weight matrices
    out = 2 * max(b_blk, 8) * HID_DIM * 4         # double-buffered output block
    return x_slab + hidden + smax + out


def _pick_b_blk(B, l_pad, x_itemsize, w_itemsize):
    vmem_cap = _vmem_capacity_bytes()
    fixed = 2 * (ESM_DIM * HID_DIM + ESM_DIM) * w_itemsize + 8 * HID_DIM * 4
    budget = max(vmem_cap // 3 - fixed, 1 << 20)
    divs = [d for d in range(1, min(B, _MAX_B_BLK) + 1)
            if B % d == 0 and _block_vmem_bytes(d, l_pad, x_itemsize) <= budget]
    if not divs:
        # TODO(synk): tile the sequence axis as well for very long proteins.
        divs = [1]
    # Prefer an even grid with >= 2 steps (feeds both v7x TensorCores evenly),
    # then any grid with >= 2 steps, then simply the largest block that fits.
    for good in (lambda g: g >= 2 and g % 2 == 0,
                 lambda g: g >= 2,
                 lambda g: True):
        cand = [d for d in divs if good(B // d)]
        if cand:
            return max(cand)
    return 1


def protein_attention_pool(token_representations, w_lin, b_lin, w_att, b_att=None,
                           *, matmul_dtype=jnp.float32, b_blk=None):
    """token_representations: (B, L_tot, 640) ESM layer-30 output (BOS at position 0).

    Returns pooled protein vectors (B, 512), matching
        pv = lin(token_reps[:, 1:, :]); w = softmax(attention(pv), dim=1)
        out = sum(w * pv, dim=1)
    """
    B, l_tot, D = token_representations.shape
    assert D == ESM_DIM and l_tot >= 2
    matmul_dtype = jnp.dtype(matmul_dtype)

    # Pad the sequence axis to a multiple of 8 so every in-kernel view is
    # (8,128)-aligned; pad rows are masked with the BOS row inside the kernel.
    # TODO(synk): ideally the upstream ESM output is already emitted pre-padded.
    l_pad = -(-l_tot // 8) * 8
    x = token_representations
    if l_pad != l_tot:
        x = jnp.pad(x, ((0, 0), (0, l_pad - l_tot), (0, 0)))
    x2d = x.reshape(B * l_pad, ESM_DIM)   # free collapse; dtype untouched (cast in-kernel)

    # Tiny resident operands (cache these host-side if the params are static).
    wl = w_lin.T.astype(matmul_dtype)                                  # (640, 512)
    v = (w_att.reshape(1, HID_DIM) @ w_lin).astype(matmul_dtype)       # (1, 640) folded attn proj
    bl = b_lin.reshape(1, HID_DIM).astype(jnp.float32)                 # (1, 512)
    # b_att intentionally unused: constant across the softmax axis -> cancels.

    if b_blk is None:
        b_blk = _pick_b_blk(B, l_pad, x2d.dtype.itemsize, matmul_dtype.itemsize)
    assert B % b_blk == 0
    grid = B // b_blk
    block_rows = b_blk * l_pad

    vmem_cap = _vmem_capacity_bytes()
    vmem_limit = min(vmem_cap * 3 // 4, 100 * 1024 * 1024)

    kernel = functools.partial(_protein_attn_kernel, b_blk=b_blk, l_pad=l_pad,
                               l_tot=l_tot, matmul_dtype=matmul_dtype)

    grid_spec = pltpu.PrefetchScalarGridSpec(
        num_scalar_prefetch=0,
        grid=(grid,),
        in_specs=[
            pl.BlockSpec((block_rows, ESM_DIM), lambda i: (i, 0)),     # activation slab
            pl.BlockSpec((ESM_DIM, HID_DIM), lambda i: (0, 0)),        # resident lin weight
            pl.BlockSpec((1, ESM_DIM), lambda i: (0, 0)),              # resident attn projection
            pl.BlockSpec((1, HID_DIM), lambda i: (0, 0)),              # resident lin bias
        ],
        # Leading grid-sized dim keeps the (b_blk, 512) minor dims equal to the
        # full array dims, so b_blk is free of the (8,128) block constraint.
        out_specs=pl.BlockSpec((1, b_blk, HID_DIM), lambda i: (i, 0, 0)),
    )

    out = pl.pallas_call(
        kernel,
        out_shape=jax.ShapeDtypeStruct((grid, b_blk, HID_DIM), jnp.float32),
        grid_spec=grid_spec,
        compiler_params=pltpu.CompilerParams(
            dimension_semantics=("parallel",),
            vmem_limit_bytes=vmem_limit,
        ),
    )(x2d, wl, v, bl)
    return out.reshape(B, HID_DIM)


def flexible_nn_classifier_forward(token_representations, params,
                                   *, matmul_dtype=jnp.float32):
    """Pallas-backed protein branch of FlexibleNNClassifier.forward."""
    return protein_attention_pool(
        token_representations,
        params["lin_w"], params["lin_b"], params["att_w"], params["att_b"],
        matmul_dtype=matmul_dtype,
    )


def _reference(token_representations, params):
    """Pure-JAX reference matching the PyTorch forward (incl. attention bias)."""
    x = token_representations[:, 1:, :]
    h = jnp.einsum("bld,hd->blh", x, params["lin_w"]) + params["lin_b"]
    s = jnp.einsum("blh,oh->blo", h, params["att_w"]) + params["att_b"]
    w = jax.nn.softmax(s, axis=1)
    return jnp.sum(w * h, axis=1)


if __name__ == "__main__":
    key = jax.random.PRNGKey(0)
    k_x1, k_x2, k_wl, k_bl, k_wa, k_ba = jax.random.split(key, 6)

    L_TOT = 17   # 16 real tokens + 1 BOS token (BOS + alignment pad masked in-kernel)

    # Deterministic parameter init (PyTorch Linear layout: (out, in)).
    params = {
        "lin_w": jax.random.normal(k_wl, (HID_DIM, ESM_DIM), jnp.float32) * 0.02,
        "lin_b": jax.random.normal(k_bl, (HID_DIM,), jnp.float32) * 0.02,
        "att_w": jax.random.normal(k_wa, (1, HID_DIM), jnp.float32) * 0.02,
        "att_b": jax.random.normal(k_ba, (1,), jnp.float32) * 0.02,
    }

    # Case 1: f32 path, odd L (exercises the pad+mask path), B=4 -> b_blk=2, grid=2.
    B1 = 4
    reps1 = jax.random.normal(k_x1, (B1, L_TOT, ESM_DIM), jnp.float32)
    out1 = jax.block_until_ready(flexible_nn_classifier_forward(reps1, params))
    ref1 = _reference(reps1, params)
    assert out1.shape == (B1, HID_DIM)
    assert jnp.allclose(out1, ref1, atol=1e-2, rtol=1e-2), "f32 path mismatch"

    # Case 2: bf16 matmul operands (in-kernel cast, f32 accumulation),
    # B=16 -> b_blk=8, grid=2 (exercises pipelining / both v7x TensorCores).
    B2 = 16
    reps2 = jax.random.normal(k_x2, (B2, L_TOT, ESM_DIM), jnp.float32)
    out2 = jax.block_until_ready(
        flexible_nn_classifier_forward(reps2, params, matmul_dtype=jnp.bfloat16))
    ref2 = _reference(reps2, params)
    assert out2.shape == (B2, HID_DIM)
    assert jnp.allclose(out2, ref2, atol=5e-2, rtol=5e-2), "bf16 path mismatch"

    print("KERNEL_OK")
</pallas_src>

<mosaic_0001>
module attributes {stable_mosaic.version = 11 : i64} {
  func.func @_protein_attn_kernel(%arg0: i32, %arg1: memref<48x640xf32, #tpu.memory_space<vmem>>, %arg2: memref<640x512xf32, #tpu.memory_space<vmem>>, %arg3: memref<1x640xf32, #tpu.memory_space<vmem>>, %arg4: memref<1x512xf32, #tpu.memory_space<vmem>>, %arg5: memref<1x2x512xf32, #tpu.memory_space<vmem>>) attributes {dimension_semantics = [#tpu.dimension_semantics<parallel>], iteration_bounds = array<i64: 2>, scalar_prefetch = 0 : i64, scratch_operands = 0 : i64, tpu.core_type = #tpu.core_type<tc>, window_params = [{transform_indices = @transform_0, window_bounds = array<i64: 48, 640>}, {pipeline_mode = #tpu.pipeline_mode<synchronous>, transform_indices = @transform_1, window_bounds = array<i64: 640, 512>}, {pipeline_mode = #tpu.pipeline_mode<synchronous>, transform_indices = @transform_2, window_bounds = array<i64: 1, 640>}, {pipeline_mode = #tpu.pipeline_mode<synchronous>, transform_indices = @transform_3, window_bounds = array<i64: 1, 512>}, {transform_indices = @transform_4, window_bounds = array<i64: 1, 2, 512>}]} {
    %c0 = arith.constant 0 : index
    %c0_0 = arith.constant 0 : index
    %0 = vector.load %arg1[%c0, %c0_0] : memref<48x640xf32, #tpu.memory_space<vmem>>, vector<48x640xf32>
    %c0_1 = arith.constant 0 : index
    %c0_2 = arith.constant 0 : index
    %1 = vector.load %arg2[%c0_1, %c0_2] : memref<640x512xf32, #tpu.memory_space<vmem>>, vector<640x512xf32>
    %cst = arith.constant dense<0.000000e+00> : vector<48x512xf32>
    %2 = tpu.matmul %0, %1, %cst {dimension_numbers = #tpu.dot_dimension_numbers<[1], [0], [0], [1], [0, 0, 1, 1], [], []>} : vector<48x640xf32>, vector<640x512xf32>, vector<48x512xf32> -> vector<48x512xf32>
    %c0_3 = arith.constant 0 : index
    %c0_4 = arith.constant 0 : index
    %3 = vector.load %arg3[%c0_3, %c0_4] : memref<1x640xf32, #tpu.memory_space<vmem>>, vector<1x640xf32>
    %cst_5 = arith.constant dense<0.000000e+00> : vector<1x48xf32>
    %4 = tpu.matmul %3, %0, %cst_5 {dimension_numbers = #tpu.dot_dimension_numbers<[1], [1], [0], [0], [0, 0, 1, 0], [], []>} : vector<1x640xf32>, vector<48x640xf32>, vector<1x48xf32> -> vector<1x48xf32>
    %5 = tpu.iota {dimensions = array<i32: 0>} : vector<2x48xi32>
    %6 = tpu.iota {dimensions = array<i32: 1>} : vector<2x48xi32>
    %c24_i32 = arith.constant 24 : i32
    %7 = vector.broadcast %c24_i32 : i32 to vector<2x48xi32>
    %8 = arith.muli %5, %7 : vector<2x48xi32>
    %c1_i32 = arith.constant 1 : i32
    %9 = vector.broadcast %c1_i32 : i32 to vector<2x48xi32>
    %10 = arith.addi %8, %9 : vector<2x48xi32>
    %11 = arith.cmpi sge, %6, %10 : vector<2x48xi32>
    %c17_i32 = arith.constant 17 : i32
    %12 = vector.broadcast %c17_i32 : i32 to vector<2x48xi32>
    %13 = arith.addi %8, %12 : vector<2x48xi32>
    %14 = arith.cmpi slt, %6, %13 : vector<2x48xi32>
    %15 = arith.andi %11, %14 : vector<2x48xi1>
    %cst_6 = arith.constant -1.000000e+30 : f32
    %16 = vector.shape_cast %4 : vector<1x48xf32> to vector<1x48xf32>
    %17 = vector.broadcast %16 : vector<1x48xf32> to vector<2x48xf32>
    %18 = vector.broadcast %cst_6 : f32 to vector<2x48xf32>
    %19 = arith.select %15, %17, %18 : vector<2x48xi1>, vector<2x48xf32>
    %cst_7 = arith.constant dense<0xFF800000> : vector<2xf32>
    %20 = vector.multi_reduction <maximumf>, %19, %cst_7 [1] : vector<2x48xf32> to vector<2xf32>
    %21 = vector.shape_cast %20 : vector<2xf32> to vector<2x1xf32>
    %22 = vector.broadcast %21 : vector<2x1xf32> to vector<2x48xf32>
    %23 = arith.subf %19, %22 : vector<2x48xf32>
    %24 = math.exp %23 : vector<2x48xf32>
    %cst_8 = arith.constant dense<0.000000e+00> : vector<2xf32>
    %25 = vector.multi_reduction <add>, %24, %cst_8 [1] : vector<2x48xf32> to vector<2xf32>
    %26 = vector.shape_cast %25 : vector<2xf32> to vector<2x1xf32>
    %27 = tpu.reciprocal %26 {approx = true} : vector<2x1xf32> -> vector<2x1xf32>
    %28 = vector.broadcast %27 : vector<2x1xf32> to vector<2x48xf32>
    %29 = arith.mulf %24, %28 : vector<2x48xf32>
    %cst_9 = arith.constant dense<0.000000e+00> : vector<2x512xf32>
    %30 = tpu.matmul %29, %2, %cst_9 {dimension_numbers = #tpu.dot_dimension_numbers<[1], [0], [0], [1], [0, 0, 1, 1], [], []>} : vector<2x48xf32>, vector<48x512xf32>, vector<2x512xf32> -> vector<2x512xf32>
    %c0_10 = arith.constant 0 : index
    %c0_11 = arith.constant 0 : index
    %31 = vector.load %arg4[%c0_10, %c0_11] : memref<1x512xf32, #tpu.memory_space<vmem>>, vector<1x512xf32>
    %32 = vector.broadcast %31 : vector<1x512xf32> to vector<2x512xf32>
    %33 = arith.addf %30, %32 : vector<2x512xf32>
    %c0_12 = arith.constant 0 : index
    %c0_13 = arith.constant 0 : index
    %c0_14 = arith.constant 0 : index
    %34 = vector.load %arg5[%c0_12, %c0_13, %c0_14] : memref<1x2x512xf32, #tpu.memory_space<vmem>>, vector<1x2x512xf32>
    %35 = vector.shape_cast %34 : vector<1x2x512xf32> to vector<2x512xf32>
    %36 = vector.shape_cast %33 : vector<2x512xf32> to vector<1x2x512xf32>
    tpu.vector_store %arg5[%c0_12, %c0_13, %c0_14], %36 {strides = array<i32>} : memref<1x2x512xf32, #tpu.memory_space<vmem>>, vector<1x2x512xf32>,
    return
  }
  func.func @transform_0(%arg0: i32) -> (i32, i32) {
    %c0_i32 = arith.constant 0 : i32
    %c0_i32_0 = arith.constant 0 : i32
    return %arg0, %c0_i32 : i32, i32
  }
  func.func @transform_1(%arg0: i32) -> (i32, i32) {
    %c0_i32 = arith.constant 0 : i32
    %c0_i32_0 = arith.constant 0 : i32
    %c0_i32_1 = arith.constant 0 : i32
    return %c0_i32, %c0_i32_0 : i32, i32
  }
  func.func @transform_2(%arg0: i32) -> (i32, i32) {
    %c0_i32 = arith.constant 0 : i32
    %c0_i32_0 = arith.constant 0 : i32
    %c0_i32_1 = arith.constant 0 : i32
    return %c0_i32, %c0_i32_0 : i32, i32
  }
  func.func @transform_3(%arg0: i32) -> (i32, i32) {
    %c0_i32 = arith.constant 0 : i32
    %c0_i32_0 = arith.constant 0 : i32
    %c0_i32_1 = arith.constant 0 : i32
    return %c0_i32, %c0_i32_0 : i32, i32
  }
  func.func @transform_4(%arg0: i32) -> (i32, i32, i32) {
    %c0_i32 = arith.constant 0 : i32
    %c0_i32_0 = arith.constant 0 : i32
    %c0_i32_1 = arith.constant 0 : i32
    return %arg0, %c0_i32, %c0_i32_0 : i32, i32, i32
  }
}

</mosaic_0001>

<llo_original>
// kernel: tpu_custom_call.1
$region0: #{tpu_custom_call.1}
  #allocation0 [shape = 'u32[]', space=smem, size = 0x4, offset = 0x4, fixed_abs, tag = 'smem constant byte address 0x4 - core index']
  #allocation1 [shape = 'u32[144,128]{1,0:T(1,128)}', space=vmem, size = 0x12000, scoped, tag = 'internal scratch']
  %s0 = inlined_call_operand.hbm [shape: f32[96,640], index: 0, kind: input, shape index: {}]
  %s1 = inlined_call_operand.hbm [shape: f32[640,512], index: 1, kind: input, shape index: {}]
  %s2 = inlined_call_operand.hbm [shape: f32[1,640], index: 2, kind: input, shape index: {}]
  %s3 = inlined_call_operand.hbm [shape: f32[1,512], index: 3, kind: input, shape index: {}]
  %s4 = inlined_call_operand.hbm [shape: f32[2,2,512], index: 4, kind: output, shape index: {}]
  %s5 = sld [smem:[#allocation0]]
  $region65: #{tpu_custom_call.1} parent=0
    _
  %s7 = ssub.s32 1, %s5
  %s8 = scalar_select 0, %s7, %s5
  $region1: #{tpu_custom_call.1} parent=0
    #allocation2 [shape = 'u8[245760]{0}', space=vmem, size = 0x3c000, scoped, tag = 'input window, operand 0']
    #allocation3 [shape = 's32[2]{0}', space=sflag, size = 0x8, scoped, tag = 'scoped memory for tpu_custom_call.1']
    #allocation4 [shape = 's32[2]{0}', space=sflag, size = 0x8, scoped, tag = 'scoped memory for tpu_custom_call.1']
    #allocation5 [shape = 'u8[1310720]{0}', space=vmem, size = 0x140000, scoped, tag = 'input window, operand 1, single buffered']
    #allocation6 [shape = 's32[1]{0}', space=sflag, size = 0x4, scoped, tag = 'scoped memory for tpu_custom_call.1']
    #allocation7 [shape = 'u8[2560]{0}', space=vmem, size = 0xc00, scoped, tag = 'input window, operand 2, single buffered']
    #allocation8 [shape = 'u8[2048]{0}', space=vmem, size = 0x800, scoped, tag = 'input window, operand 3, single buffered']
    #allocation9 [shape = 's32[1]{0}', space=sflag, size = 0x4, scoped, tag = 'scoped memory for tpu_custom_call.1']
    #allocation10 [shape = 'u8[8192]{0}', space=vmem, size = 0x2000, scoped, tag = 'output window, operand 0']
    %9 = vsyncpa [#allocation3], 0
    %s10 = scalar_lea.sflag [#allocation3], 1
    %11 = vsyncpa %s10, 0
    %12 = vsyncpa [#allocation6], 0
    %13 = vsyncpa [#allocation9], 0
    %14 = vsyncpa [#allocation4], 0
    %s15 = scalar_lea.sflag [#allocation4], 1
    %16 = vsyncpa %s15, 0
    loop: start=0, step=1, limit=4
    $region2: #{tpu_custom_call.1} parent=1 // loop_pre_header
      _
    $region3: #{tpu_custom_call.1} parent=1 // loop_header
      %s18 = sphi 0, %s22
      %p19 = scmp.ge.s32.totalorder %s18, 4
      %s28 = sphi 0, %s30
      %s31 = sphi 0, %s28
      %s32 = sphi 0, %s31
      %s48 = sphi 0, %s32
      %s52 = sphi 0, %s52
      %s54 = sphi 0, %s52
      %s55 = sphi 0, %s54
      %s69 = sphi 0, %s55
      %s73 = sphi 0, %s73
      %s75 = sphi 0, %s73
      %s76 = sphi 0, %s75
      %s90 = sphi 0, %s76
      %s94 = sphi 0, %s94
      %s96 = sphi 0, %s94
      %s97 = sphi 0, %s96
      %s111 = sphi 0, %s97
      %s117 = sphi 0, %s119
      %s120 = sphi 0, %s117
      %s121 = sphi 0, %s120
      %s137 = sphi 0, %s121
    $region4: #{tpu_custom_call.1} parent=1 // loop_header_branch
      %21 = sbr.rel (%p19) target = $region8
    $region5: #{tpu_custom_call.1} parent=1 // loop_body
      %s23 = ssub.s32 %s18, 1
      %s24 = ssub.s32 %s18, 2
      %s25 = sadd.s32 %s18, 1
      %s26 = ssub.s32 %s18, %s25
      %p27 = scmp.eq.s32.totalorder %s26, 0
      %s29 = sadd.s32 %s28, 1
      %s30 = scalar_select %p27, %s28, %s29
      %p33 = pneg %p27
      %p34 = scmp.eq.s32.totalorder %s18, 1
      %p35 = por %p33, %p34
      %p36 = scmp.ne.s32.totalorder %s28, %s31
      %p37 = scmp.eq.s32.totalorder %s18, 0
      %p38 = por %p36, %p37
      %p39 = scmp.ne.s32.totalorder %s28, %s31
      %p40 = scmp.eq.s32.totalorder %s23, 1
      %p41 = por %p39, %p40
      %p42 = scmp.ne.s32.totalorder %s31, %s32
      %p43 = scmp.eq.s32.totalorder %s23, 0
      %p44 = por %p42, %p43
      %p45 = scmp.ne.s32.totalorder %s31, %s32
      %p46 = scmp.eq.s32.totalorder %s24, 1
      %p47 = por %p45, %p46
      %p49 = scmp.ne.s32.totalorder %s32, %s48
      %p50 = scmp.eq.s32.totalorder %s24, 0
      %p51 = por %p49, %p50
      %s53 = sadd.s32 %s52, 1
      %p56 = scmp.eq.s32.totalorder %s18, 1
      %p57 = scmp.ne.s32.totalorder %s52, %s54
      %p58 = scmp.eq.s32.totalorder %s18, 0
      %p59 = por %p57, %p58
      %p60 = scmp.ne.s32.totalorder %s52, %s54
      %p61 = scmp.eq.s32.totalorder %s23, 1
      %p62 = por %p60, %p61
      %p63 = scmp.ne.s32.totalorder %s54, %s55
      %p64 = scmp.eq.s32.totalorder %s23, 0
      %p65 = por %p63, %p64
      %p66 = scmp.ne.s32.totalorder %s54, %s55
      %p67 = scmp.eq.s32.totalorder %s24, 1
      %p68 = por %p66, %p67
      %p70 = scmp.ne.s32.totalorder %s55, %s69
      %p71 = scmp.eq.s32.totalorder %s24, 0
      %p72 = por %p70, %p71
      %s74 = sadd.s32 %s73, 1
      %p77 = scmp.eq.s32.totalorder %s18, 1
      %p78 = scmp.ne.s32.totalorder %s73, %s75
      %p79 = scmp.eq.s32.totalorder %s18, 0
      %p80 = por %p78, %p79
      %p81 = scmp.ne.s32.totalorder %s73, %s75
      %p82 = scmp.eq.s32.totalorder %s23, 1
      %p83 = por %p81, %p82
      %p84 = scmp.ne.s32.totalorder %s75, %s76
      %p85 = scmp.eq.s32.totalorder %s23, 0
      %p86 = por %p84, %p85
      %p87 = scmp.ne.s32.totalorder %s75, %s76
      %p88 = scmp.eq.s32.totalorder %s24, 1
      %p89 = por %p87, %p88
      %p91 = scmp.ne.s32.totalorder %s76, %s90
      %p92 = scmp.eq.s32.totalorder %s24, 0
      %p93 = por %p91, %p92
      %s95 = sadd.s32 %s94, 1
      %p98 = scmp.eq.s32.totalorder %s18, 1
      %p99 = scmp.ne.s32.totalorder %s94, %s96
      %p100 = scmp.eq.s32.totalorder %s18, 0
      %p101 = por %p99, %p100
      %p102 = scmp.ne.s32.totalorder %s94, %s96
      %p103 = scmp.eq.s32.totalorder %s23, 1
      %p104 = por %p102, %p103
      %p105 = scmp.ne.s32.totalorder %s96, %s97
      %p106 = scmp.eq.s32.totalorder %s23, 0
      %p107 = por %p105, %p106
      %p108 = scmp.ne.s32.totalorder %s96, %s97
      %p109 = scmp.eq.s32.totalorder %s24, 1
      %p110 = por %p108, %p109
      %p112 = scmp.ne.s32.totalorder %s97, %s111
      %p113 = scmp.eq.s32.totalorder %s24, 0
      %p114 = por %p112, %p113
      %s115 = ssub.s32 %s18, %s25
      %p116 = scmp.eq.s32.totalorder %s115, 0
      %s118 = sadd.s32 %s117, 1
      %s119 = scalar_select %p116, %s117, %s118
      %p122 = pneg %p116
      %p123 = scmp.eq.s32.totalorder %s18, 1
      %p124 = por %p122, %p123
      %p125 = scmp.ne.s32.totalorder %s117, %s120
      %p126 = scmp.eq.s32.totalorder %s18, 0
      %p127 = por %p125, %p126
      %p128 = scmp.ne.s32.totalorder %s117, %s120
      %p129 = scmp.eq.s32.totalorder %s23, 1
      %p130 = por %p128, %p129
      %p131 = scmp.ne.s32.totalorder %s120, %s121
      %p132 = scmp.eq.s32.totalorder %s23, 0
      %p133 = por %p131, %p132
      %p134 = scmp.ne.s32.totalorder %s120, %s121
      %p135 = scmp.eq.s32.totalorder %s24, 1
      %p136 = por %p134, %p135
      %p138 = scmp.ne.s32.totalorder %s121, %s137
      %p139 = scmp.eq.s32.totalorder %s24, 0
      %p140 = por %p138, %p139
      %p141 = scmp.le.s32.totalorder 1, %s18
      %p142 = scmp.lt.s32.totalorder %s18, 3
      %p143 = pnand %p141, %p142
      %p144 = pneg %p143
      // Predicated region
      $region9: #{tpu_custom_call.1} parent=5 // pred_check
        _
      $region10: #{tpu_custom_call.1} parent=5 // pred_check_branch
        %146 = sbr.rel (%p143) target = $region12
      $region11: #{tpu_custom_call.1} parent=5 // pred_region
        %s147 = ssub.s32 %s18, 1
        // Predicated region
        $region13: #{tpu_custom_call.1} parent=11 // pred_check
          %p148 = pneg %p65
        $region14: #{tpu_custom_call.1} parent=11 // pred_check_branch
          %150 = sbr.rel (%p148) target = $region16
        $region15: #{tpu_custom_call.1} parent=11 // pred_region
          %s152 = ssub.s32 40960, 40960
          %153 = vsyncadd [#allocation6], %s152
          %s154 = sshll.u32 [#allocation5], 4
          %s155 = int_to_ptr.vmem [resolvable:$true] %s154
          %160 = dma.hbm_to_vmem [thread:$0]  %s1, 40960, %s155, [#allocation6], 512, 512, 32
        $region16: #{tpu_custom_call.1} parent=11 // pred_fallthru
          _
        // Predicated region
        $region17: #{tpu_custom_call.1} parent=11 // pred_check
          %p161 = pneg %p86
        $region18: #{tpu_custom_call.1} parent=11 // pred_check_branch
          %163 = sbr.rel (%p161) target = $region20
        $region19: #{tpu_custom_call.1} parent=11 // pred_region
          %s165 = ssub.s32 80, 80
          %166 = vsyncadd [#allocation6], %s165
          %s168 = sshll.u32 [#allocation7], 4
          %s169 = int_to_ptr.vmem [resolvable:$true] %s168
          %171 = dma.hbm_to_vmem [thread:$0]  %s2, 80, %s169, [#allocation6]
        $region20: #{tpu_custom_call.1} parent=11 // pred_fallthru
          _
        // Predicated region
        $region21: #{tpu_custom_call.1} parent=11 // pred_check
          %p172 = pneg %p107
        $region22: #{tpu_custom_call.1} parent=11 // pred_check_branch
          %174 = sbr.rel (%p172) target = $region24
        $region23: #{tpu_custom_call.1} parent=11 // pred_region
          %s176 = ssub.s32 64, 64
          %177 = vsyncadd [#allocation9], %s176
          %s179 = sshll.u32 [#allocation8], 4
          %s180 = int_to_ptr.vmem [resolvable:$true] %s179
          %182 = dma.hbm_to_vmem [thread:$0]  %s3, 64, %s180, [#allocation9]
        $region24: #{tpu_custom_call.1} parent=11 // pred_fallthru
          _
      $region12: #{tpu_custom_call.1} parent=5 // pred_fallthru
        _
      %p183 = scmp.lt.s32.totalorder %s18, 2
      // Predicated region
      $region25: #{tpu_custom_call.1} parent=5 // pred_check
        %p184 = pneg %p183
      $region26: #{tpu_custom_call.1} parent=5 // pred_check_branch
        %186 = sbr.rel (%p184) target = $region28
      $region27: #{tpu_custom_call.1} parent=5 // pred_region
        // Predicated region
        $region29: #{tpu_custom_call.1} parent=27 // pred_check
          %p187 = pneg %p38
        $region30: #{tpu_custom_call.1} parent=27 // pred_check_branch
          %189 = sbr.rel (%p187) target = $region32
        $region31: #{tpu_custom_call.1} parent=27 // pred_region
          %s190 = sand.u32 %s28, 1
          %s191 = scalar_lea.sflag [#allocation3], %s190
          %s192 = sand.u32 %s28, 1
          %s193 = smul.addr %s192, 240
          %s194 = scalar_lea.vmem [#allocation2], %s193
          %s195 = smul.u32 6, %s18
          %s197 = ssub.s32 3840, 3840
          %198 = vsyncadd %s191, %s197
          %s199 = smul.addr %s195, 5
          %s200 = smul.addr %s199, 128
          %s201 = scalar_lea.hbm %s0, %s200
          %s202 = sshll.u32 %s194, 4
          %s203 = int_to_ptr.vmem [resolvable:$true] %s202
          %208 = dma.hbm_to_vmem [thread:$0]  %s201, 3840, %s203, %s191, 640, 640, 40
        $region32: #{tpu_custom_call.1} parent=27 // pred_fallthru
          _
      $region28: #{tpu_custom_call.1} parent=5 // pred_fallthru
        _
      %p209 = scmp.le.s32.totalorder 1, %s18
      %p210 = scmp.lt.s32.totalorder %s18, 3
      %p211 = pnand %p209, %p210
      %p212 = pneg %p211
      // Predicated region
      $region33: #{tpu_custom_call.1} parent=5 // pred_check
        _
      $region34: #{tpu_custom_call.1} parent=5 // pred_check_branch
        %214 = sbr.rel (%p211) target = $region36
      $region35: #{tpu_custom_call.1} parent=5 // pred_region
        %s215 = ssub.s32 %s18, 1
        %s216 = sand.u32 %s31, 1
        %s217 = scalar_lea.sflag [#allocation3], %s216
        %s218 = sand.u32 %s31, 1
        %s219 = smul.addr %s218, 240
        %s220 = scalar_lea.vmem [#allocation2], %s219
        // Predicated region
        $region37: #{tpu_custom_call.1} parent=35 // pred_check
          %p221 = pneg %p44
        $region38: #{tpu_custom_call.1} parent=35 // pred_check_branch
          %223 = sbr.rel (%p221) target = $region40
        $region39: #{tpu_custom_call.1} parent=35 // pred_region
          %224 = dma.done %s217, 3840
        $region40: #{tpu_custom_call.1} parent=35 // pred_fallthru
          _
        // Predicated region
        $region41: #{tpu_custom_call.1} parent=35 // pred_check
          %p225 = pneg %p65
        $region42: #{tpu_custom_call.1} parent=35 // pred_check_branch
          %227 = sbr.rel (%p225) target = $region44
        $region43: #{tpu_custom_call.1} parent=35 // pred_region
          %228 = dma.done [#allocation6], 40960
        $region44: #{tpu_custom_call.1} parent=35 // pred_fallthru
          _
        // Predicated region
        $region45: #{tpu_custom_call.1} parent=35 // pred_check
          %p229 = pneg %p86
        $region46: #{tpu_custom_call.1} parent=35 // pred_check_branch
          %231 = sbr.rel (%p229) target = $region48
        $region47: #{tpu_custom_call.1} parent=35 // pred_region
          %232 = dma.done [#allocation6], 80
        $region48: #{tpu_custom_call.1} parent=35 // pred_fallthru
          _
        // Predicated region
        $region49: #{tpu_custom_call.1} parent=35 // pred_check
          %p233 = pneg %p107
        $region50: #{tpu_custom_call.1} parent=35 // pred_check_branch
          %235 = sbr.rel (%p233) target = $region52
        $region51: #{tpu_custom_call.1} parent=35 // pred_region
          %236 = dma.done [#allocation9], 64
        $region52: #{tpu_custom_call.1} parent=35 // pred_fallthru
          _
        %s237 = sand.u32 %s31, 1
        %s238 = scalar_lea.sflag [#allocation3], %s237
        %s239 = sand.u32 %s31, 1
        %s240 = smul.addr %s239, 240
        %s241 = scalar_lea.vmem [#allocation2], %s240
        %p242 = pneg %p44
        %p243 = pneg %p41
        %p244 = pneg %p65
        %p245 = pneg %p62
        %p246 = pneg %p86
        %p247 = pneg %p83
        %p248 = pneg %p107
        %p249 = pneg %p104
        %p250 = pneg %p133
        %p251 = pneg %p130
        %s252 = sand.u32 %s120, 1
        %s253 = scalar_lea.sflag [#allocation4], %s252
        %s254 = sand.u32 %s120, 1
        %s255 = smul.addr %s254, 8
        %s256 = scalar_lea.vmem [#allocation10], %s255
        %s257 = smul.u32 6, %s23
        %v258 = vld [vmem:[%s220] sm:$0xff]
        %v259 = vld [vmem:[%s220 + $0x8] sm:$0xff]
        %v260 = vld [vmem:[%s220 + $0x10] sm:$0xff]
        %v261 = vld [vmem:[%s220 + $0x18] sm:$0xff]
        %v262 = vld [vmem:[%s220 + $0x20] sm:$0xff]
        %v263 = vld [vmem:[%s220 + $0x28] sm:$0xff]
        %v264 = vld [vmem:[%s220 + $0x30] sm:$0xff]
        %v265 = vld [vmem:[%s220 + $0x38] sm:$0xff]
        %v266 = vld [vmem:[%s220 + $0x40] sm:$0xff]
        %v267 = vld [vmem:[%s220 + $0x48] sm:$0xff]
        %v268 = vld [vmem:[%s220 + $0x50] sm:$0xff]
        %v269 = vld [vmem:[%s220 + $0x58] sm:$0xff]
        %v270 = vld [vmem:[%s220 + $0x60] sm:$0xff]
        %v271 = vld [vmem:[%s220 + $0x68] sm:$0xff]
        %v272 = vld [vmem:[%s220 + $0x70] sm:$0xff]
        %v273 = vld [vmem:[%s220 + $0x78] sm:$0xff]
        %v274 = vld [vmem:[%s220 + $0x80] sm:$0xff]
        %v275 = vld [vmem:[%s220 + $0x88] sm:$0xff]
        %v276 = vld [vmem:[%s220 + $0x90] sm:$0xff]
        %v277 = vld [vmem:[%s220 + $0x98] sm:$0xff]
        %v278 = vld [vmem:[%s220 + $0xa0] sm:$0xff]
        %v279 = vld [vmem:[%s220 + $0xa8] sm:$0xff]
        %v280 = vld [vmem:[%s220 + $0xb0] sm:$0xff]
        %v281 = vld [vmem:[%s220 + $0xb8] sm:$0xff]
        %v282 = vld [vmem:[%s220 + $0xc0] sm:$0xff]
        %v283 = vld [vmem:[%s220 + $0xc8] sm:$0xff]
        %v284 = vld [vmem:[%s220 + $0xd0] sm:$0xff]
        %v285 = vld [vmem:[%s220 + $0xd8] sm:$0xff]
        %v286 = vld [vmem:[%s220 + $0xe0] sm:$0xff]
        %v287 = vld [vmem:[%s220 + $0xe8] sm:$0xff]
        %v288 = vld [vmem:[#allocation5] sm:$0xff]
        %v289 = vld [vmem:[#allocation5 + $0x8] sm:$0xff]
        %v290 = vld [vmem:[#allocation5 + $0x10] sm:$0xff]
        %v291 = vld [vmem:[#allocation5 + $0x18] sm:$0xff]
        %v292 = vld [vmem:[#allocation5 + $0x20] sm:$0xff]
        %v293 = vld [vmem:[#allocation5 + $0x28] sm:$0xff]
        %v294 = vld [vmem:[#allocation5 + $0x30] sm:$0xff]
        %v295 = vld [vmem:[#allocation5 + $0x38] sm:$0xff]
        %v296 = vld [vmem:[#allocation5 + $0x40] sm:$0xff]
        %v297 = vld [vmem:[#allocation5 + $0x48] sm:$0xff]
        %v298 = vld [vmem:[#allocation5 + $0x50] sm:$0xff]
        %v299 = vld [vmem:[#allocation5 + $0x58] sm:$0xff]
        %v300 = vld [vmem:[#allocation5 + $0x60] sm:$0xff]
        %v301 = vld [vmem:[#allocation5 + $0x68] sm:$0xff]
        %v302 = vld [vmem:[#allocation5 + $0x70] sm:$0xff]
        %v303 = vld [vmem:[#allocation5 + $0x78] sm:$0xff]
        %v304 = vld [vmem:[#allocation5 + $0x80] sm:$0xff]
        %v305 = vld [vmem:[#allocation5 + $0x88] sm:$0xff]
        %v306 = vld [vmem:[#allocation5 + $0x90] sm:$0xff]
        %v307 = vld [vmem:[#allocation5 + $0x98] sm:$0xff]
        %v308 = vld [vmem:[#allocation5 + $0xa0] sm:$0xff]
        %v309 = vld [vmem:[#allocation5 + $0xa8] sm:$0xff]
        %v310 = vld [vmem:[#allocation5 + $0xb0] sm:$0xff]
        %v311 = vld [vmem:[#allocation5 + $0xb8] sm:$0xff]
        %v312 = vld [vmem:[#allocation5 + $0xc0] sm:$0xff]
        %v313 = vld [vmem:[#allocation5 + $0xc8] sm:$0xff]
        %v314 = vld [vmem:[#allocation5 + $0xd0] sm:$0xff]
        %v315 = vld [vmem:[#allocation5 + $0xd8] sm:$0xff]
        %v316 = vld [vmem:[#allocation5 + $0xe0] sm:$0xff]
        %v317 = vld [vmem:[#allocation5 + $0xe8] sm:$0xff]
        %v318 = vld [vmem:[#allocation5 + $0xf0] sm:$0xff]
        %v319 = vld [vmem:[#allocation5 + $0xf8] sm:$0xff]
        %v320 = vld [vmem:[#allocation5 + $0x100] sm:$0xff]
        %v321 = vld [vmem:[#allocation5 + $0x108] sm:$0xff]
        %v322 = vld [vmem:[#allocation5 + $0x110] sm:$0xff]
        %v323 = vld [vmem:[#allocation5 + $0x118] sm:$0xff]
        %v324 = vld [vmem:[#allocation5 + $0x120] sm:$0xff]
        %v325 = vld [vmem:[#allocation5 + $0x128] sm:$0xff]
        %v326 = vld [vmem:[#allocation5 + $0x130] sm:$0xff]
        %v327 = vld [vmem:[#allocation5 + $0x138] sm:$0xff]
        %v328 = vld [vmem:[#allocation5 + $0x140] sm:$0xff]
        %v329 = vld [vmem:[#allocation5 + $0x148] sm:$0xff]
        %v330 = vld [vmem:[#allocation5 + $0x150] sm:$0xff]
        %v331 = vld [vmem:[#allocation5 + $0x158] sm:$0xff]
        %v332 = vld [vmem:[#allocation5 + $0x160] sm:$0xff]
        %v333 = vld [vmem:[#allocation5 + $0x168] sm:$0xff]
        %v334 = vld [vmem:[#allocation5 + $0x170] sm:$0xff]
        %v335 = vld [vmem:[#allocation5 + $0x178] sm:$0xff]
        %v336 = vld [vmem:[#allocation5 + $0x180] sm:$0xff]
        %v337 = vld [vmem:[#allocation5 + $0x188] sm:$0xff]
        %v338 = vld [vmem:[#allocation5 + $0x190] sm:$0xff]
        %v339 = vld [vmem:[#allocation5 + $0x198] sm:$0xff]
        %v340 = vld [vmem:[#allocation5 + $0x1a0] sm:$0xff]
        %v341 = vld [vmem:[#allocation5 + $0x1a8] sm:$0xff]
        %v342 = vld [vmem:[#allocation5 + $0x1b0] sm:$0xff]
        %v343 = vld [vmem:[#allocation5 + $0x1b8] sm:$0xff]
        %v344 = vld [vmem:[#allocation5 + $0x1c0] sm:$0xff]
        %v345 = vld [vmem:[#allocation5 + $0x1c8] sm:$0xff]
        %v346 = vld [vmem:[#allocation5 + $0x1d0] sm:$0xff]
        %v347 = vld [vmem:[#allocation5 + $0x1d8] sm:$0xff]
        %v348 = vld [vmem:[#allocation5 + $0x1e0] sm:$0xff]
        %v349 = vld [vmem:[#allocation5 + $0x1e8] sm:$0xff]
        %v350 = vld [vmem:[#allocation5 + $0x1f0] sm:$0xff]
        %v351 = vld [vmem:[#allocation5 + $0x1f8] sm:$0xff]
        %v352 = vld [vmem:[#allocation5 + $0x200] sm:$0xff]
        %v353 = vld [vmem:[#allocation5 + $0x208] sm:$0xff]
        %v354 = vld [vmem:[#allocation5 + $0x210] sm:$0xff]
        %v355 = vld [vmem:[#allocation5 + $0x218] sm:$0xff]
        %v356 = vld [vmem:[#allocation5 + $0x220] sm:$0xff]
        %v357 = vld [vmem:[#allocation5 + $0x228] sm:$0xff]
        %v358 = vld [vmem:[#allocation5 + $0x230] sm:$0xff]
        %v359 = vld [vmem:[#allocation5 + $0x238] sm:$0xff]
        %v360 = vld [vmem:[#allocation5 + $0x240] sm:$0xff]
        %v361 = vld [vmem:[#allocation5 + $0x248] sm:$0xff]
        %v362 = vld [vmem:[#allocation5 + $0x250] sm:$0xff]
        %v363 = vld [vmem:[#allocation5 + $0x258] sm:$0xff]
        %v364 = vld [vmem:[#allocation5 + $0x260] sm:$0xff]
        %v365 = vld [vmem:[#allocation5 + $0x268] sm:$0xff]
        %v366 = vld [vmem:[#allocation5 + $0x270] sm:$0xff]
        %v367 = vld [vmem:[#allocation5 + $0x278] sm:$0xff]
        %v368 = vld [vmem:[#allocation5 + $0x280] sm:$0xff]
        %v369 = vld [vmem:[#allocation5 + $0x288] sm:$0xff]
        %v370 = vld [vmem:[#allocation5 + $0x290] sm:$0xff]
        %v371 = vld [vmem:[#allocation5 + $0x298] sm:$0xff]
        %v372 = vld [vmem:[#allocation5 + $0x2a0] sm:$0xff]
        %v373 = vld [vmem:[#allocation5 + $0x2a8] sm:$0xff]
        %v374 = vld [vmem:[#allocation5 + $0x2b0] sm:$0xff]
        %v375 = vld [vmem:[#allocation5 + $0x2b8] sm:$0xff]
        %v376 = vld [vmem:[#allocation5 + $0x2c0] sm:$0xff]
        %v377 = vld [vmem:[#allocation5 + $0x2c8] sm:$0xff]
        %v378 = vld [vmem:[#allocation5 + $0x2d0] sm:$0xff]
        %v379 = vld [vmem:[#allocation5 + $0x2d8] sm:$0xff]
        %v380 = vld [vmem:[#allocation5 + $0x2e0] sm:$0xff]
        %v381 = vld [vmem:[#allocation5 + $0x2e8] sm:$0xff]
        %v382 = vld [vmem:[#allocation5 + $0x2f0] sm:$0xff]
        %v383 = vld [vmem:[#allocation5 + $0x2f8] sm:$0xff]
        %v384 = vld [vmem:[#allocation5 + $0x300] sm:$0xff]
        %v385 = vld [vmem:[#allocation5 + $0x308] sm:$0xff]
        %v386 = vld [vmem:[#allocation5 + $0x310] sm:$0xff]
        %v387 = vld [vmem:[#allocation5 + $0x318] sm:$0xff]
        %v388 = vld [vmem:[#allocation5 + $0x320] sm:$0xff]
        %v389 = vld [vmem:[#allocation5 + $0x328] sm:$0xff]
        %v390 = vld [vmem:[#allocation5 + $0x330] sm:$0xff]
        %v391 = vld [vmem:[#allocation5 + $0x338] sm:$0xff]
        %v392 = vld [vmem:[#allocation5 + $0x340] sm:$0xff]
        %v393 = vld [vmem:[#allocation5 + $0x348] sm:$0xff]
        %v394 = vld [vmem:[#allocation5 + $0x350] sm:$0xff]
        %v395 = vld [vmem:[#allocation5 + $0x358] sm:$0xff]
        %v396 = vld [vmem:[#allocation5 + $0x360] sm:$0xff]
        %v397 = vld [vmem:[#allocation5 + $0x368] sm:$0xff]
        %v398 = vld [vmem:[#allocation5 + $0x370] sm:$0xff]
        %v399 = vld [vmem:[#allocation5 + $0x378] sm:$0xff]
        %v400 = vld [vmem:[#allocation5 + $0x380] sm:$0xff]
        %v401 = vld [vmem:[#allocation5 + $0x388] sm:$0xff]
        %v402 = vld [vmem:[#allocation5 + $0x390] sm:$0xff]
        %v403 = vld [vmem:[#allocation5 + $0x398] sm:$0xff]
        %v404 = vld [vmem:[#allocation5 + $0x3a0] sm:$0xff]
        %v405 = vld [vmem:[#allocation5 + $0x3a8] sm:$0xff]
        %v406 = vld [vmem:[#allocation5 + $0x3b0] sm:$0xff]
        %v407 = vld [vmem:[#allocation5 + $0x3b8] sm:$0xff]
        %v408 = vld [vmem:[#allocation5 + $0x3c0] sm:$0xff]
        %v409 = vld [vmem:[#allocation5 + $0x3c8] sm:$0xff]
        %v410 = vld [vmem:[#allocation5 + $0x3d0] sm:$0xff]
        %v411 = vld [vmem:[#allocation5 + $0x3d8] sm:$0xff]
        %v412 = vld [vmem:[#allocation5 + $0x3e0] sm:$0xff]
        %v413 = vld [vmem:[#allocation5 + $0x3e8] sm:$0xff]
        %v414 = vld [vmem:[#allocation5 + $0x3f0] sm:$0xff]
        %v415 = vld [vmem:[#allocation5 + $0x3f8] sm:$0xff]
        %v416 = vld [vmem:[#allocation5 + $0x400] sm:$0xff]
        %v417 = vld [vmem:[#allocation5 + $0x408] sm:$0xff]
        %v418 = vld [vmem:[#allocation5 + $0x410] sm:$0xff]
        %v419 = vld [vmem:[#allocation5 + $0x418] sm:$0xff]
        %v420 = vld [vmem:[#allocation5 + $0x420] sm:$0xff]
        %v421 = vld [vmem:[#allocation5 + $0x428] sm:$0xff]
        %v422 = vld [vmem:[#allocation5 + $0x430] sm:$0xff]
        %v423 = vld [vmem:[#allocation5 + $0x438] sm:$0xff]
        %v424 = vld [vmem:[#allocation5 + $0x440] sm:$0xff]
        %v425 = vld [vmem:[#allocation5 + $0x448] sm:$0xff]
        %v426 = vld [vmem:[#allocation5 + $0x450] sm:$0xff]
        %v427 = vld [vmem:[#allocation5 + $0x458] sm:$0xff]
        %v428 = vld [vmem:[#allocation5 + $0x460] sm:$0xff]
        %v429 = vld [vmem:[#allocation5 + $0x468] sm:$0xff]
        %v430 = vld [vmem:[#allocation5 + $0x470] sm:$0xff]
        %v431 = vld [vmem:[#allocation5 + $0x478] sm:$0xff]
        %v432 = vld [vmem:[#allocation5 + $0x480] sm:$0xff]
        %v433 = vld [vmem:[#allocation5 + $0x488] sm:$0xff]
        %v434 = vld [vmem:[#allocation5 + $0x490] sm:$0xff]
        %v435 = vld [vmem:[#allocation5 + $0x498] sm:$0xff]
        %v436 = vld [vmem:[#allocation5 + $0x4a0] sm:$0xff]
        %v437 = vld [vmem:[#allocation5 + $0x4a8] sm:$0xff]
        %v438 = vld [vmem:[#allocation5 + $0x4b0] sm:$0xff]
        %v439 = vld [vmem:[#allocation5 + $0x4b8] sm:$0xff]
        %v440 = vld [vmem:[#allocation5 + $0x4c0] sm:$0xff]
        %v441 = vld [vmem:[#allocation5 + $0x4c8] sm:$0xff]
        %v442 = vld [vmem:[#allocation5 + $0x4d0] sm:$0xff]
        %v443 = vld [vmem:[#allocation5 + $0x4d8] sm:$0xff]
        %v444 = vld [vmem:[#allocation5 + $0x4e0] sm:$0xff]
        %v445 = vld [vmem:[#allocation5 + $0x4e8] sm:$0xff]
        %v446 = vld [vmem:[#allocation5 + $0x4f0] sm:$0xff]
        %v447 = vld [vmem:[#allocation5 + $0x4f8] sm:$0xff]
        %v448 = vld [vmem:[#allocation5 + $0x500] sm:$0xff]
        %v449 = vld [vmem:[#allocation5 + $0x508] sm:$0xff]
        %v450 = vld [vmem:[#allocation5 + $0x510] sm:$0xff]
        %v451 = vld [vmem:[#allocation5 + $0x518] sm:$0xff]
        %v452 = vld [vmem:[#allocation5 + $0x520] sm:$0xff]
        %v453 = vld [vmem:[#allocation5 + $0x528] sm:$0xff]
        %v454 = vld [vmem:[#allocation5 + $0x530] sm:$0xff]
        %v455 = vld [vmem:[#allocation5 + $0x538] sm:$0xff]
        %v456 = vld [vmem:[#allocation5 + $0x540] sm:$0xff]
        %v457 = vld [vmem:[#allocation5 + $0x548] sm:$0xff]
        %v458 = vld [vmem:[#allocation5 + $0x550] sm:$0xff]
        %v459 = vld [vmem:[#allocation5 + $0x558] sm:$0xff]
        %v460 = vld [vmem:[#allocation5 + $0x560] sm:$0xff]
        %v461 = vld [vmem:[#allocation5 + $0x568] sm:$0xff]
        %v462 = vld [vmem:[#allocation5 + $0x570] sm:$0xff]
        %v463 = vld [vmem:[#allocation5 + $0x578] sm:$0xff]
        %v464 = vld [vmem:[#allocation5 + $0x580] sm:$0xff]
        %v465 = vld [vmem:[#allocation5 + $0x588] sm:$0xff]
        %v466 = vld [vmem:[#allocation5 + $0x590] sm:$0xff]
        %v467 = vld [vmem:[#allocation5 + $0x598] sm:$0xff]
        %v468 = vld [vmem:[#allocation5 + $0x5a0] sm:$0xff]
        %v469 = vld [vmem:[#allocation5 + $0x5a8] sm:$0xff]
        %v470 = vld [vmem:[#allocation5 + $0x5b0] sm:$0xff]
        %v471 = vld [vmem:[#allocation5 + $0x5b8] sm:$0xff]
        %v472 = vld [vmem:[#allocation5 + $0x5c0] sm:$0xff]
        %v473 = vld [vmem:[#allocation5 + $0x5c8] sm:$0xff]
        %v474 = vld [vmem:[#allocation5 + $0x5d0] sm:$0xff]
        %v475 = vld [vmem:[#allocation5 + $0x5d8] sm:$0xff]
        %v476 = vld [vmem:[#allocation5 + $0x5e0] sm:$0xff]
        %v477 = vld [vmem:[#allocation5 + $0x5e8] sm:$0xff]
        %v478 = vld [vmem:[#allocation5 + $0x5f0] sm:$0xff]
        %v479 = vld [vmem:[#allocation5 + $0x5f8] sm:$0xff]
        %v480 = vld [vmem:[#allocation5 + $0x600] sm:$0xff]
        %v481 = vld [vmem:[#allocation5 + $0x608] sm:$0xff]
        %v482 = vld [vmem:[#allocation5 + $0x610] sm:$0xff]
        %v483 = vld [vmem:[#allocation5 + $0x618] sm:$0xff]
        %v484 = vld [vmem:[#allocation5 + $0x620] sm:$0xff]
        %v485 = vld [vmem:[#allocation5 + $0x628] sm:$0xff]
        %v486 = vld [vmem:[#allocation5 + $0x630] sm:$0xff]
        %v487 = vld [vmem:[#allocation5 + $0x638] sm:$0xff]
        %v488 = vld [vmem:[#allocation5 + $0x640] sm:$0xff]
        %v489 = vld [vmem:[#allocation5 + $0x648] sm:$0xff]
        %v490 = vld [vmem:[#allocation5 + $0x650] sm:$0xff]
        %v491 = vld [vmem:[#allocation5 + $0x658] sm:$0xff]
        %v492 = vld [vmem:[#allocation5 + $0x660] sm:$0xff]
        %v493 = vld [vmem:[#allocation5 + $0x668] sm:$0xff]
        %v494 = vld [vmem:[#allocation5 + $0x670] sm:$0xff]
        %v495 = vld [vmem:[#allocation5 + $0x678] sm:$0xff]
        %v496 = vld [vmem:[#allocation5 + $0x680] sm:$0xff]
        %v497 = vld [vmem:[#allocation5 + $0x688] sm:$0xff]
        %v498 = vld [vmem:[#allocation5 + $0x690] sm:$0xff]
        %v499 = vld [vmem:[#allocation5 + $0x698] sm:$0xff]
        %v500 = vld [vmem:[#allocation5 + $0x6a0] sm:$0xff]
        %v501 = vld [vmem:[#allocation5 + $0x6a8] sm:$0xff]
        %v502 = vld [vmem:[#allocation5 + $0x6b0] sm:$0xff]
        %v503 = vld [vmem:[#allocation5 + $0x6b8] sm:$0xff]
        %v504 = vld [vmem:[#allocation5 + $0x6c0] sm:$0xff]
        %v505 = vld [vmem:[#allocation5 + $0x6c8] sm:$0xff]
        %v506 = vld [vmem:[#allocation5 + $0x6d0] sm:$0xff]
        %v507 = vld [vmem:[#allocation5 + $0x6d8] sm:$0xff]
        %v508 = vld [vmem:[#allocation5 + $0x6e0] sm:$0xff]
        %v509 = vld [vmem:[#allocation5 + $0x6e8] sm:$0xff]
        %v510 = vld [vmem:[#allocation5 + $0x6f0] sm:$0xff]
        %v511 = vld [vmem:[#allocation5 + $0x6f8] sm:$0xff]
        %v512 = vld [vmem:[#allocation5 + $0x700] sm:$0xff]
        %v513 = vld [vmem:[#allocation5 + $0x708] sm:$0xff]
        %v514 = vld [vmem:[#allocation5 + $0x710] sm:$0xff]
        %v515 = vld [vmem:[#allocation5 + $0x718] sm:$0xff]
        %v516 = vld [vmem:[#allocation5 + $0x720] sm:$0xff]
        %v517 = vld [vmem:[#allocation5 + $0x728] sm:$0xff]
        %v518 = vld [vmem:[#allocation5 + $0x730] sm:$0xff]
        %v519 = vld [vmem:[#allocation5 + $0x738] sm:$0xff]
        %v520 = vld [vmem:[#allocation5 + $0x740] sm:$0xff]
        %v521 = vld [vmem:[#allocation5 + $0x748] sm:$0xff]
        %v522 = vld [vmem:[#allocation5 + $0x750] sm:$0xff]
        %v523 = vld [vmem:[#allocation5 + $0x758] sm:$0xff]
        %v524 = vld [vmem:[#allocation5 + $0x760] sm:$0xff]
        %v525 = vld [vmem:[#allocation5 + $0x768] sm:$0xff]
        %v526 = vld [vmem:[#allocation5 + $0x770] sm:$0xff]
        %v527 = vld [vmem:[#allocation5 + $0x778] sm:$0xff]
        %v528 = vld [vmem:[#allocation5 + $0x780] sm:$0xff]
        %v529 = vld [vmem:[#allocation5 + $0x788] sm:$0xff]
        %v530 = vld [vmem:[#allocation5 + $0x790] sm:$0xff]
        %v531 = vld [vmem:[#allocation5 + $0x798] sm:$0xff]
        %v532 = vld [vmem:[#allocation5 + $0x7a0] sm:$0xff]
        %v533 = vld [vmem:[#allocation5 + $0x7a8] sm:$0xff]
        %v534 = vld [vmem:[#allocation5 + $0x7b0] sm:$0xff]
        %v535 = vld [vmem:[#allocation5 + $0x7b8] sm:$0xff]
        %v536 = vld [vmem:[#allocation5 + $0x7c0] sm:$0xff]
        %v537 = vld [vmem:[#allocation5 + $0x7c8] sm:$0xff]
        %v538 = vld [vmem:[#allocation5 + $0x7d0] sm:$0xff]
        %v539 = vld [vmem:[#allocation5 + $0x7d8] sm:$0xff]
        %v540 = vld [vmem:[#allocation5 + $0x7e0] sm:$0xff]
        %v541 = vld [vmem:[#allocation5 + $0x7e8] sm:$0xff]
        %v542 = vld [vmem:[#allocation5 + $0x7f0] sm:$0xff]
        %v543 = vld [vmem:[#allocation5 + $0x7f8] sm:$0xff]
        %v544 = vld [vmem:[#allocation5 + $0x800] sm:$0xff]
        %v545 = vld [vmem:[#allocation5 + $0x808] sm:$0xff]
        %v546 = vld [vmem:[#allocation5 + $0x810] sm:$0xff]
        %v547 = vld [vmem:[#allocation5 + $0x818] sm:$0xff]
        %v548 = vld [vmem:[#allocation5 + $0x820] sm:$0xff]
        %v549 = vld [vmem:[#allocation5 + $0x828] sm:$0xff]
        %v550 = vld [vmem:[#allocation5 + $0x830] sm:$0xff]
        %v551 = vld [vmem:[#allocation5 + $0x838] sm:$0xff]
        %v552 = vld [vmem:[#allocation5 + $0x840] sm:$0xff]
        %v553 = vld [vmem:[#allocation5 + $0x848] sm:$0xff]
        %v554 = vld [vmem:[#allocation5 + $0x850] sm:$0xff]
        %v555 = vld [vmem:[#allocation5 + $0x858] sm:$0xff]
        %v556 = vld [vmem:[#allocation5 + $0x860] sm:$0xff]
        %v557 = vld [vmem:[#allocation5 + $0x868] sm:$0xff]
        %v558 = vld [vmem:[#allocation5 + $0x870] sm:$0xff]
        %v559 = vld [vmem:[#allocation5 + $0x878] sm:$0xff]
        %v560 = vld [vmem:[#allocation5 + $0x880] sm:$0xff]
        %v561 = vld [vmem:[#allocation5 + $0x888] sm:$0xff]
        %v562 = vld [vmem:[#allocation5 + $0x890] sm:$0xff]
        %v563 = vld [vmem:[#allocation5 + $0x898] sm:$0xff]
        %v564 = vld [vmem:[#allocation5 + $0x8a0] sm:$0xff]
        %v565 = vld [vmem:[#allocation5 + $0x8a8] sm:$0xff]
        %v566 = vld [vmem:[#allocation5 + $0x8b0] sm:$0xff]
        %v567 = vld [vmem:[#allocation5 + $0x8b8] sm:$0xff]
        %v568 = vld [vmem:[#allocation5 + $0x8c0] sm:$0xff]
        %v569 = vld [vmem:[#allocation5 + $0x8c8] sm:$0xff]
        %v570 = vld [vmem:[#allocation5 + $0x8d0] sm:$0xff]
        %v571 = vld [vmem:[#allocation5 + $0x8d8] sm:$0xff]
        %v572 = vld [vmem:[#allocation5 + $0x8e0] sm:$0xff]
        %v573 = vld [vmem:[#allocation5 + $0x8e8] sm:$0xff]
        %v574 = vld [vmem:[#allocation5 + $0x8f0] sm:$0xff]
        %v575 = vld [vmem:[#allocation5 + $0x8f8] sm:$0xff]
        %v576 = vld [vmem:[#allocation5 + $0x900] sm:$0xff]
        %v577 = vld [vmem:[#allocation5 + $0x908] sm:$0xff]
        %v578 = vld [vmem:[#allocation5 + $0x910] sm:$0xff]
        %v579 = vld [vmem:[#allocation5 + $0x918] sm:$0xff]
        %v580 = vld [vmem:[#allocation5 + $0x920] sm:$0xff]
        %v581 = vld [vmem:[#allocation5 + $0x928] sm:$0xff]
        %v582 = vld [vmem:[#allocation5 + $0x930] sm:$0xff]
        %v583 = vld [vmem:[#allocation5 + $0x938] sm:$0xff]
        %v584 = vld [vmem:[#allocation5 + $0x940] sm:$0xff]
        %v585 = vld [vmem:[#allocation5 + $0x948] sm:$0xff]
        %v586 = vld [vmem:[#allocation5 + $0x950] sm:$0xff]
        %v587 = vld [vmem:[#allocation5 + $0x958] sm:$0xff]
        %v588 = vld [vmem:[#allocation5 + $0x960] sm:$0xff]
        %v589 = vld [vmem:[#allocation5 + $0x968] sm:$0xff]
        %v590 = vld [vmem:[#allocation5 + $0x970] sm:$0xff]
        %v591 = vld [vmem:[#allocation5 + $0x978] sm:$0xff]
        %v592 = vld [vmem:[#allocation5 + $0x980] sm:$0xff]
        %v593 = vld [vmem:[#allocation5 + $0x988] sm:$0xff]
        %v594 = vld [vmem:[#allocation5 + $0x990] sm:$0xff]
        %v595 = vld [vmem:[#allocation5 + $0x998] sm:$0xff]
        %v596 = vld [vmem:[#allocation5 + $0x9a0] sm:$0xff]
        %v597 = vld [vmem:[#allocation5 + $0x9a8] sm:$0xff]
        %v598 = vld [vmem:[#allocation5 + $0x9b0] sm:$0xff]
        %v599 = vld [vmem:[#allocation5 + $0x9b8] sm:$0xff]
        %v600 = vld [vmem:[#allocation5 + $0x9c0] sm:$0xff]
        %v601 = vld [vmem:[#allocation5 + $0x9c8] sm:$0xff]
        %v602 = vld [vmem:[#allocation5 + $0x9d0] sm:$0xff]
        %v603 = vld [vmem:[#allocation5 + $0x9d8] sm:$0xff]
        %v604 = vld [vmem:[#allocation5 + $0x9e0] sm:$0xff]
        %v605 = vld [vmem:[#allocation5 + $0x9e8] sm:$0xff]
        %v606 = vld [vmem:[#allocation5 + $0x9f0] sm:$0xff]
        %v607 = vld [vmem:[#allocation5 + $0x9f8] sm:$0xff]
        %608 = vmatprep.subr.mxu0 %v349
        %609 = vmatpush1.msra.mxu0 %v348
        %610 = vmatprep.subr.mxu0 %v345
        %611 = vmatpush1.msra.mxu0 %v344
        %612 = vmatprep.subr.mxu0 %v341
        %613 = vmatpush1.msra.mxu0 %v340
        %614 = vmatprep.subr.mxu0 %v337
        %615 = vmatpush1.msra.mxu0 %v336
        %616 = vmatprep.subr.mxu0 %v333
        %617 = vmatpush1.msra.mxu0 %v332
        %618 = vmatprep.subr.mxu0 %v329
        %619 = vmatpush1.msra.mxu0 %v328
        %620 = vmatprep.subr.mxu0 %v325
        %621 = vmatpush1.msra.mxu0 %v324
        %622 = vmatprep.subr.mxu0 %v321
        %623 = vmatpush1.msra.mxu0 %v320
        %624 = vmatprep.subr.mxu0 %v317
        %625 = vmatpush1.msra.mxu0 %v316
        %626 = vmatprep.subr.mxu0 %v313
        %627 = vmatpush1.msra.mxu0 %v312
        %628 = vmatprep.subr.mxu0 %v309
        %629 = vmatpush1.msra.mxu0 %v308
        %630 = vmatprep.subr.mxu0 %v305
        %631 = vmatpush1.msra.mxu0 %v304
        %632 = vmatprep.subr.mxu0 %v301
        %633 = vmatpush1.msra.mxu0 %v300
        %634 = vmatprep.subr.mxu0 %v297
        %635 = vmatpush1.msra.mxu0 %v296
        %636 = vmatprep.subr.mxu0 %v293
        %637 = vmatpush1.msra.mxu0 %v292
        %638 = vmatprep.subr.mxu0 %v289
        %639 = vmatpush1.msra.mxu0 %v288
        %640 = vmatprep.subr.mxu0 %v413
        %641 = vmatpush2.msra.mxu0 %v412
        %642 = vmatprep.subr.mxu0 %v409
        %643 = vmatpush2.msra.mxu0 %v408
        %644 = vmatprep.subr.mxu0 %v405
        %645 = vmatpush2.msra.mxu0 %v404
        %646 = vmatprep.subr.mxu0 %v401
        %647 = vmatpush2.msra.mxu0 %v400
        %648 = vmatprep.subr.mxu0 %v397
        %649 = vmatpush2.msra.mxu0 %v396
        %650 = vmatprep.subr.mxu0 %v393
        %651 = vmatpush2.msra.mxu0 %v392
        %652 = vmatprep.subr.mxu0 %v389
        %653 = vmatpush2.msra.mxu0 %v388
        %654 = vmatprep.subr.mxu0 %v385
        %655 = vmatpush2.msra.mxu0 %v384
        %656 = vmatprep.subr.mxu0 %v381
        %657 = vmatpush2.msra.mxu0 %v380
        %658 = vmatprep.subr.mxu0 %v377
        %659 = vmatpush2.msra.mxu0 %v376
        %660 = vmatprep.subr.mxu0 %v373
        %661 = vmatpush2.msra.mxu0 %v372
        %662 = vmatprep.subr.mxu0 %v369
        %663 = vmatpush2.msra.mxu0 %v368
        %664 = vmatprep.subr.mxu0 %v365
        %665 = vmatpush2.msra.mxu0 %v364
        %666 = vmatprep.subr.mxu0 %v361
        %667 = vmatpush2.msra.mxu0 %v360
        %668 = vmatprep.subr.mxu0 %v357
        %669 = vmatpush2.msra.mxu0 %v356
        %670 = vmatprep.subr.mxu0 %v353
        %671 = vmatpush2.msra.mxu0 %v352
        %672 = vmatprep.mubr.f32.mxu0 %v259
        %673 = vmatmul.mubr.f32.gmra.mxu0 %v258
        %v674 = vpop.f32.mrf.mxu0
        %v675 = vadd.f32 0.0, %v674
        %v676 = vpop.f32.mrf.mxu0
        %v677 = vadd.f32 0.0, %v676
        %678 = vmatprep.mubr.f32.mxu0 %v264
        %679 = vmatmul.mubr.f32.gmra.mxu0 %v263
        %v680 = vpop.f32.mrf.mxu0
        %v681 = vadd.f32 0.0, %v680
        %v682 = vpop.f32.mrf.mxu0
        %v683 = vadd.f32 0.0, %v682
        %684 = vmatprep.mubr.f32.mxu0 %v269
        %685 = vmatmul.mubr.f32.gmra.mxu0 %v268
        %v686 = vpop.f32.mrf.mxu0
        %v687 = vadd.f32 0.0, %v686
        %v688 = vpop.f32.mrf.mxu0
        %v689 = vadd.f32 0.0, %v688
        %690 = vmatprep.mubr.f32.mxu0 %v274
        %691 = vmatmul.mubr.f32.gmra.mxu0 %v273
        %v692 = vpop.f32.mrf.mxu0
        %v693 = vadd.f32 0.0, %v692
        %v694 = vpop.f32.mrf.mxu0
        %v695 = vadd.f32 0.0, %v694
        %696 = vmatprep.mubr.f32.mxu0 %v279
        %697 = vmatmul.mubr.f32.gmra.mxu0 %v278
        %v698 = vpop.f32.mrf.mxu0
        %v699 = vadd.f32 0.0, %v698
        %v700 = vpop.f32.mrf.mxu0
        %v701 = vadd.f32 0.0, %v700
        %702 = vmatprep.mubr.f32.mxu0 %v284
        %703 = vmatmul.mubr.f32.gmra.mxu0 %v283
        %v704 = vpop.f32.mrf.mxu0
        %v705 = vadd.f32 0.0, %v704
        %v706 = vpop.f32.mrf.mxu0
        %v707 = vadd.f32 0.0, %v706
        %708 = vdwg.mxu0
        %709 = vmatprep.subr.mxu0 %v477
        %710 = vmatpush1.msra.mxu0 %v476
        %711 = vmatprep.subr.mxu0 %v473
        %712 = vmatpush1.msra.mxu0 %v472
        %713 = vmatprep.subr.mxu0 %v469
        %714 = vmatpush1.msra.mxu0 %v468
        %715 = vmatprep.subr.mxu0 %v465
        %716 = vmatpush1.msra.mxu0 %v464
        %717 = vmatprep.subr.mxu0 %v461
        %718 = vmatpush1.msra.mxu0 %v460
        %719 = vmatprep.subr.mxu0 %v457
        %720 = vmatpush1.msra.mxu0 %v456
        %721 = vmatprep.subr.mxu0 %v453
        %722 = vmatpush1.msra.mxu0 %v452
        %723 = vmatprep.subr.mxu0 %v449
        %724 = vmatpush1.msra.mxu0 %v448
        %725 = vmatprep.subr.mxu0 %v445
        %726 = vmatpush1.msra.mxu0 %v444
        %727 = vmatprep.subr.mxu0 %v441
        %728 = vmatpush1.msra.mxu0 %v440
        %729 = vmatprep.subr.mxu0 %v437
        %730 = vmatpush1.msra.mxu0 %v436
        %731 = vmatprep.subr.mxu0 %v433
        %732 = vmatpush1.msra.mxu0 %v432
        %733 = vmatprep.subr.mxu0 %v429
        %734 = vmatpush1.msra.mxu0 %v428
        %735 = vmatprep.subr.mxu0 %v425
        %736 = vmatpush1.msra.mxu0 %v424
        %737 = vmatprep.subr.mxu0 %v421
        %738 = vmatpush1.msra.mxu0 %v420
        %739 = vmatprep.subr.mxu0 %v417
        %740 = vmatpush1.msra.mxu0 %v416
        %741 = vmatprep.subr.mxu0 %v541
        %742 = vmatpush2.msra.mxu0 %v540
        %743 = vmatprep.subr.mxu0 %v537
        %744 = vmatpush2.msra.mxu0 %v536
        %745 = vmatprep.subr.mxu0 %v533
        %746 = vmatpush2.msra.mxu0 %v532
        %747 = vmatprep.subr.mxu0 %v529
        %748 = vmatpush2.msra.mxu0 %v528
        %749 = vmatprep.subr.mxu0 %v525
        %750 = vmatpush2.msra.mxu0 %v524
        %751 = vmatprep.subr.mxu0 %v521
        %752 = vmatpush2.msra.mxu0 %v520
        %753 = vmatprep.subr.mxu0 %v517
        %754 = vmatpush2.msra.mxu0 %v516
        %755 = vmatprep.subr.mxu0 %v513
        %756 = vmatpush2.msra.mxu0 %v512
        %757 = vmatprep.subr.mxu0 %v509
        %758 = vmatpush2.msra.mxu0 %v508
        %759 = vmatprep.subr.mxu0 %v505
        %760 = vmatpush2.msra.mxu0 %v504
        %761 = vmatprep.subr.mxu0 %v501
        %762 = vmatpush2.msra.mxu0 %v500
        %763 = vmatprep.subr.mxu0 %v497
        %764 = vmatpush2.msra.mxu0 %v496
        %765 = vmatprep.subr.mxu0 %v493
        %766 = vmatpush2.msra.mxu0 %v492
        %767 = vmatprep.subr.mxu0 %v489
        %768 = vmatpush2.msra.mxu0 %v488
        %769 = vmatprep.subr.mxu0 %v485
        %770 = vmatpush2.msra.mxu0 %v484
        %771 = vmatprep.subr.mxu0 %v481
        %772 = vmatpush2.msra.mxu0 %v480
        %773 = vmatprep.mubr.f32.mxu0 %v261
        %774 = vmatmul.mubr.f32.gmra.mxu0 %v260
        %v775 = vpop.f32.mrf.mxu0
        %v776 = vadd.f32 %v675, %v775
        %v777 = vpop.f32.mrf.mxu0
        %v778 = vadd.f32 %v677, %v777
        %779 = vmatprep.mubr.f32.mxu0 %v266
        %780 = vmatmul.mubr.f32.gmra.mxu0 %v265
        %v781 = vpop.f32.mrf.mxu0
        %v782 = vadd.f32 %v681, %v781
        %v783 = vpop.f32.mrf.mxu0
        %v784 = vadd.f32 %v683, %v783
        %785 = vmatprep.mubr.f32.mxu0 %v271
        %786 = vmatmul.mubr.f32.gmra.mxu0 %v270
        %v787 = vpop.f32.mrf.mxu0
        %v788 = vadd.f32 %v687, %v787
        %v789 = vpop.f32.mrf.mxu0
        %v790 = vadd.f32 %v689, %v789
        %791 = vmatprep.mubr.f32.mxu0 %v276
        %792 = vmatmul.mubr.f32.gmra.mxu0 %v275
        %v793 = vpop.f32.mrf.mxu0
        %v794 = vadd.f32 %v693, %v793
        %v795 = vpop.f32.mrf.mxu0
        %v796 = vadd.f32 %v695, %v795
        %797 = vmatprep.mubr.f32.mxu0 %v281
        %798 = vmatmul.mubr.f32.gmra.mxu0 %v280
        %v799 = vpop.f32.mrf.mxu0
        %v800 = vadd.f32 %v699, %v799
        %v801 = vpop.f32.mrf.mxu0
        %v802 = vadd.f32 %v701, %v801
        %803 = vmatprep.mubr.f32.mxu0 %v286
        %804 = vmatmul.mubr.f32.gmra.mxu0 %v285
        %v805 = vpop.f32.mrf.mxu0
        %v806 = vadd.f32 %v705, %v805
        %v807 = vpop.f32.mrf.mxu0
        %v808 = vadd.f32 %v707, %v807
        %809 = vdwg.mxu0
        %810 = vmatprep.subr.mxu0 %v605
        %811 = vmatpush1.msra.mxu0 %v604
        %812 = vmatprep.subr.mxu0 %v601
        %813 = vmatpush1.msra.mxu0 %v600
        %814 = vmatprep.subr.mxu0 %v597
        %815 = vmatpush1.msra.mxu0 %v596
        %816 = vmatprep.subr.mxu0 %v593
        %817 = vmatpush1.msra.mxu0 %v592
        %818 = vmatprep.subr.mxu0 %v589
        %819 = vmatpush1.msra.mxu0 %v588
        %820 = vmatprep.subr.mxu0 %v585
        %821 = vmatpush1.msra.mxu0 %v584
        %822 = vmatprep.subr.mxu0 %v581
        %823 = vmatpush1.msra.mxu0 %v580
        %824 = vmatprep.subr.mxu0 %v577
        %825 = vmatpush1.msra.mxu0 %v576
        %826 = vmatprep.subr.mxu0 %v573
        %827 = vmatpush1.msra.mxu0 %v572
        %828 = vmatprep.subr.mxu0 %v569
        %829 = vmatpush1.msra.mxu0 %v568
        %830 = vmatprep.subr.mxu0 %v565
        %831 = vmatpush1.msra.mxu0 %v564
        %832 = vmatprep.subr.mxu0 %v561
        %833 = vmatpush1.msra.mxu0 %v560
        %834 = vmatprep.subr.mxu0 %v557
        %835 = vmatpush1.msra.mxu0 %v556
        %836 = vmatprep.subr.mxu0 %v553
        %837 = vmatpush1.msra.mxu0 %v552
        %838 = vmatprep.subr.mxu0 %v549
        %839 = vmatpush1.msra.mxu0 %v548
        %840 = vmatprep.subr.mxu0 %v545
        %841 = vmatpush1.msra.mxu0 %v544
        %842 = vmatprep.subr.mxu0 0.0
        %843 = vmatpush2.msra.mxu0 0.0
        %844 = vmatprep.subr.mxu0 0.0
        %845 = vmatpush2.msra.mxu0 0.0
        %846 = vmatprep.subr.mxu0 0.0
        %847 = vmatpush2.msra.mxu0 0.0
        %848 = vmatprep.subr.mxu0 0.0
        %849 = vmatpush2.msra.mxu0 0.0
        %850 = vmatprep.subr.mxu0 0.0
        %851 = vmatpush2.msra.mxu0 0.0
        %852 = vmatprep.subr.mxu0 0.0
        %853 = vmatpush2.msra.mxu0 0.0
        %854 = vmatprep.subr.mxu0 0.0
        %855 = vmatpush2.msra.mxu0 0.0
        %856 = vmatprep.subr.mxu0 0.0
        %857 = vmatpush2.msra.mxu0 0.0
        %858 = vmatprep.subr.mxu0 0.0
        %859 = vmatpush2.msra.mxu0 0.0
        %860 = vmatprep.subr.mxu0 0.0
        %861 = vmatpush2.msra.mxu0 0.0
        %862 = vmatprep.subr.mxu0 0.0
        %863 = vmatpush2.msra.mxu0 0.0
        %864 = vmatprep.subr.mxu0 0.0
        %865 = vmatpush2.msra.mxu0 0.0
        %866 = vmatprep.subr.mxu0 0.0
        %867 = vmatpush2.msra.mxu0 0.0
        %868 = vmatprep.subr.mxu0 0.0
        %869 = vmatpush2.msra.mxu0 0.0
        %870 = vmatprep.subr.mxu0 0.0
        %871 = vmatpush2.msra.mxu0 0.0
        %872 = vmatprep.subr.mxu0 0.0
        %873 = vmatpush2.msra.mxu0 0.0
        %874 = vmatprep.mubr.f32.mxu0 0.0
        %875 = vmatmul.mubr.f32.gmra.mxu0 %v262
        %v876 = vpop.f32.mrf.mxu0
        %v877 = vadd.f32 %v776, %v876
        %v878 = vpop.f32.mrf.mxu0
        %v879 = vadd.f32 %v778, %v878
        %880 = vmatprep.mubr.f32.mxu0 0.0
        %881 = vmatmul.mubr.f32.gmra.mxu0 %v267
        %v882 = vpop.f32.mrf.mxu0
        %v883 = vadd.f32 %v782, %v882
        %v884 = vpop.f32.mrf.mxu0
        %v885 = vadd.f32 %v784, %v884
        %886 = vmatprep.mubr.f32.mxu0 0.0
        %887 = vmatmul.mubr.f32.gmra.mxu0 %v272
        %v888 = vpop.f32.mrf.mxu0
        %v889 = vadd.f32 %v788, %v888
        %v890 = vpop.f32.mrf.mxu0
        %v891 = vadd.f32 %v790, %v890
        %892 = vmatprep.mubr.f32.mxu0 0.0
        %893 = vmatmul.mubr.f32.gmra.mxu0 %v277
        %v894 = vpop.f32.mrf.mxu0
        %v895 = vadd.f32 %v794, %v894
        %v896 = vpop.f32.mrf.mxu0
        %v897 = vadd.f32 %v796, %v896
        %898 = vmatprep.mubr.f32.mxu0 0.0
        %899 = vmatmul.mubr.f32.gmra.mxu0 %v282
        %v900 = vpop.f32.mrf.mxu0
        %v901 = vadd.f32 %v800, %v900
        %v902 = vpop.f32.mrf.mxu0
        %v903 = vadd.f32 %v802, %v902
        %904 = vmatprep.mubr.f32.mxu0 0.0
        %905 = vmatmul.mubr.f32.gmra.mxu0 %v287
        %v906 = vpop.f32.mrf.mxu0
        %v907 = vadd.f32 %v806, %v906
        %v908 = vpop.f32.mrf.mxu0
        %v909 = vadd.f32 %v808, %v908
        %910 = vdwg.mxu0
        %911 = vmatprep.subr.mxu0 %v351
        %912 = vmatpush1.msra.mxu0 %v350
        %913 = vmatprep.subr.mxu0 %v347
        %914 = vmatpush1.msra.mxu0 %v346
        %915 = vmatprep.subr.mxu0 %v343
        %916 = vmatpush1.msra.mxu0 %v342
        %917 = vmatprep.subr.mxu0 %v339
        %918 = vmatpush1.msra.mxu0 %v338
        %919 = vmatprep.subr.mxu0 %v335
        %920 = vmatpush1.msra.mxu0 %v334
        %921 = vmatprep.subr.mxu0 %v331
        %922 = vmatpush1.msra.mxu0 %v330
        %923 = vmatprep.subr.mxu0 %v327
        %924 = vmatpush1.msra.mxu0 %v326
        %925 = vmatprep.subr.mxu0 %v323
        %926 = vmatpush1.msra.mxu0 %v322
        %927 = vmatprep.subr.mxu0 %v319
        %928 = vmatpush1.msra.mxu0 %v318
        %929 = vmatprep.subr.mxu0 %v315
        %930 = vmatpush1.msra.mxu0 %v314
        %931 = vmatprep.subr.mxu0 %v311
        %932 = vmatpush1.msra.mxu0 %v310
        %933 = vmatprep.subr.mxu0 %v307
        %934 = vmatpush1.msra.mxu0 %v306
        %935 = vmatprep.subr.mxu0 %v303
        %936 = vmatpush1.msra.mxu0 %v302
        %937 = vmatprep.subr.mxu0 %v299
        %938 = vmatpush1.msra.mxu0 %v298
        %939 = vmatprep.subr.mxu0 %v295
        %940 = vmatpush1.msra.mxu0 %v294
        %941 = vmatprep.subr.mxu0 %v291
        %942 = vmatpush1.msra.mxu0 %v290
        %943 = vmatprep.subr.mxu0 %v415
        %944 = vmatpush2.msra.mxu0 %v414
        %945 = vmatprep.subr.mxu0 %v411
        %946 = vmatpush2.msra.mxu0 %v410
        %947 = vmatprep.subr.mxu0 %v407
        %948 = vmatpush2.msra.mxu0 %v406
        %949 = vmatprep.subr.mxu0 %v403
        %950 = vmatpush2.msra.mxu0 %v402
        %951 = vmatprep.subr.mxu0 %v399
        %952 = vmatpush2.msra.mxu0 %v398
        %953 = vmatprep.subr.mxu0 %v395
        %954 = vmatpush2.msra.mxu0 %v394
        %955 = vmatprep.subr.mxu0 %v391
        %956 = vmatpush2.msra.mxu0 %v390
        %957 = vmatprep.subr.mxu0 %v387
        %958 = vmatpush2.msra.mxu0 %v386
        %959 = vmatprep.subr.mxu0 %v383
        %960 = vmatpush2.msra.mxu0 %v382
        %961 = vmatprep.subr.mxu0 %v379
        %962 = vmatpush2.msra.mxu0 %v378
        %963 = vmatprep.subr.mxu0 %v375
        %964 = vmatpush2.msra.mxu0 %v374
        %965 = vmatprep.subr.mxu0 %v371
        %966 = vmatpush2.msra.mxu0 %v370
        %967 = vmatprep.subr.mxu0 %v367
        %968 = vmatpush2.msra.mxu0 %v366
        %969 = vmatprep.subr.mxu0 %v363
        %970 = vmatpush2.msra.mxu0 %v362
        %971 = vmatprep.subr.mxu0 %v359
        %972 = vmatpush2.msra.mxu0 %v358
        %973 = vmatprep.subr.mxu0 %v355
        %974 = vmatpush2.msra.mxu0 %v354
        %975 = vmatprep.mubr.f32.mxu0 %v259
        %976 = vmatmul.mubr.f32.gmra.mxu0 %v258
        %v977 = vpop.f32.mrf.mxu0
        %v978 = vadd.f32 0.0, %v977
        %v979 = vpop.f32.mrf.mxu0
        %v980 = vadd.f32 0.0, %v979
        %981 = vmatprep.mubr.f32.mxu0 %v264
        %982 = vmatmul.mubr.f32.gmra.mxu0 %v263
        %v983 = vpop.f32.mrf.mxu0
        %v984 = vadd.f32 0.0, %v983
        %v985 = vpop.f32.mrf.mxu0
        %v986 = vadd.f32 0.0, %v985
        %987 = vmatprep.mubr.f32.mxu0 %v269
        %988 = vmatmul.mubr.f32.gmra.mxu0 %v268
        %v989 = vpop.f32.mrf.mxu0
        %v990 = vadd.f32 0.0, %v989
        %v991 = vpop.f32.mrf.mxu0
        %v992 = vadd.f32 0.0, %v991
        %993 = vmatprep.mubr.f32.mxu0 %v274
        %994 = vmatmul.mubr.f32.gmra.mxu0 %v273
        %v995 = vpop.f32.mrf.mxu0
        %v996 = vadd.f32 0.0, %v995
        %v997 = vpop.f32.mrf.mxu0
        %v998 = vadd.f32 0.0, %v997
        %999 = vmatprep.mubr.f32.mxu0 %v279
        %1000 = vmatmul.mubr.f32.gmra.mxu0 %v278
        %v1001 = vpop.f32.mrf.mxu0
        %v1002 = vadd.f32 0.0, %v1001
        %v1003 = vpop.f32.mrf.mxu0
        %v1004 = vadd.f32 0.0, %v1003
        %1005 = vmatprep.mubr.f32.mxu0 %v284
        %1006 = vmatmul.mubr.f32.gmra.mxu0 %v283
        %v1007 = vpop.f32.mrf.mxu0
        %v1008 = vadd.f32 0.0, %v1007
        %v1009 = vpop.f32.mrf.mxu0
        %v1010 = vadd.f32 0.0, %v1009
        %1011 = vdwg.mxu0
        %1012 = vmatprep.subr.mxu0 %v479
        %1013 = vmatpush1.msra.mxu0 %v478
        %1014 = vmatprep.subr.mxu0 %v475
        %1015 = vmatpush1.msra.mxu0 %v474
        %1016 = vmatprep.subr.mxu0 %v471
        %1017 = vmatpush1.msra.mxu0 %v470
        %1018 = vmatprep.subr.mxu0 %v467
        %1019 = vmatpush1.msra.mxu0 %v466
        %1020 = vmatprep.subr.mxu0 %v463
        %1021 = vmatpush1.msra.mxu0 %v462
        %1022 = vmatprep.subr.mxu0 %v459
        %1023 = vmatpush1.msra.mxu0 %v458
        %1024 = vmatprep.subr.mxu0 %v455
        %1025 = vmatpush1.msra.mxu0 %v454
        %1026 = vmatprep.subr.mxu0 %v451
        %1027 = vmatpush1.msra.mxu0 %v450
        %1028 = vmatprep.subr.mxu0 %v447
        %1029 = vmatpush1.msra.mxu0 %v446
        %1030 = vmatprep.subr.mxu0 %v443
        %1031 = vmatpush1.msra.mxu0 %v442
        %1032 = vmatprep.subr.mxu0 %v439
        %1033 = vmatpush1.msra.mxu0 %v438
        %1034 = vmatprep.subr.mxu0 %v435
        %1035 = vmatpush1.msra.mxu0 %v434
        %1036 = vmatprep.subr.mxu0 %v431
        %1037 = vmatpush1.msra.mxu0 %v430
        %1038 = vmatprep.subr.mxu0 %v427
        %1039 = vmatpush1.msra.mxu0 %v426
        %1040 = vmatprep.subr.mxu0 %v423
        %1041 = vmatpush1.msra.mxu0 %v422
        %1042 = vmatprep.subr.mxu0 %v419
        %1043 = vmatpush1.msra.mxu0 %v418
        %1044 = vmatprep.subr.mxu0 %v543
        %1045 = vmatpush2.msra.mxu0 %v542
        %1046 = vmatprep.subr.mxu0 %v539
        %1047 = vmatpush2.msra.mxu0 %v538
        %1048 = vmatprep.subr.mxu0 %v535
        %1049 = vmatpush2.msra.mxu0 %v534
        %1050 = vmatprep.subr.mxu0 %v531
        %1051 = vmatpush2.msra.mxu0 %v530
        %1052 = vmatprep.subr.mxu0 %v527
        %1053 = vmatpush2.msra.mxu0 %v526
        %1054 = vmatprep.subr.mxu0 %v523
        %1055 = vmatpush2.msra.mxu0 %v522
        %1056 = vmatprep.subr.mxu0 %v519
        %1057 = vmatpush2.msra.mxu0 %v518
        %1058 = vmatprep.subr.mxu0 %v515
        %1059 = vmatpush2.msra.mxu0 %v514
        %1060 = vmatprep.subr.mxu0 %v511
        %1061 = vmatpush2.msra.mxu0 %v510
        %1062 = vmatprep.subr.mxu0 %v507
        %1063 = vmatpush2.msra.mxu0 %v506
        %1064 = vmatprep.subr.mxu0 %v503
        %1065 = vmatpush2.msra.mxu0 %v502
        %1066 = vmatprep.subr.mxu0 %v499
        %1067 = vmatpush2.msra.mxu0 %v498
        %1068 = vmatprep.subr.mxu0 %v495
        %1069 = vmatpush2.msra.mxu0 %v494
        %1070 = vmatprep.subr.mxu0 %v491
        %1071 = vmatpush2.msra.mxu0 %v490
        %1072 = vmatprep.subr.mxu0 %v487
        %1073 = vmatpush2.msra.mxu0 %v486
        %1074 = vmatprep.subr.mxu0 %v483
        %1075 = vmatpush2.msra.mxu0 %v482
        %1076 = vmatprep.mubr.f32.mxu0 %v261
        %1077 = vmatmul.mubr.f32.gmra.mxu0 %v260
        %v1078 = vpop.f32.mrf.mxu0
        %v1079 = vadd.f32 %v978, %v1078
        %v1080 = vpop.f32.mrf.mxu0
        %v1081 = vadd.f32 %v980, %v1080
        %1082 = vmatprep.mubr.f32.mxu0 %v266
        %1083 = vmatmul.mubr.f32.gmra.mxu0 %v265
        %v1084 = vpop.f32.mrf.mxu0
        %v1085 = vadd.f32 %v984, %v1084
        %v1086 = vpop.f32.mrf.mxu0
        %v1087 = vadd.f32 %v986, %v1086
        %1088 = vmatprep.mubr.f32.mxu0 %v271
        %1089 = vmatmul.mubr.f32.gmra.mxu0 %v270
        %v1090 = vpop.f32.mrf.mxu0
        %v1091 = vadd.f32 %v990, %v1090
        %v1092 = vpop.f32.mrf.mxu0
        %v1093 = vadd.f32 %v992, %v1092
        %1094 = vmatprep.mubr.f32.mxu0 %v276
        %1095 = vmatmul.mubr.f32.gmra.mxu0 %v275
        %v1096 = vpop.f32.mrf.mxu0
        %v1097 = vadd.f32 %v996, %v1096
        %v1098 = vpop.f32.mrf.mxu0
        %v1099 = vadd.f32 %v998, %v1098
        %1100 = vmatprep.mubr.f32.mxu0 %v281
        %1101 = vmatmul.mubr.f32.gmra.mxu0 %v280
        %v1102 = vpop.f32.mrf.mxu0
        %v1103 = vadd.f32 %v1002, %v1102
        %v1104 = vpop.f32.mrf.mxu0
        %v1105 = vadd.f32 %v1004, %v1104
        %1106 = vmatprep.mubr.f32.mxu0 %v286
        %1107 = vmatmul.mubr.f32.gmra.mxu0 %v285
        %v1108 = vpop.f32.mrf.mxu0
        %v1109 = vadd.f32 %v1008, %v1108
        %v1110 = vpop.f32.mrf.mxu0
        %v1111 = vadd.f32 %v1010, %v1110
        %1112 = vdwg.mxu0
        %1113 = vmatprep.subr.mxu0 %v607
        %1114 = vmatpush1.msra.mxu0 %v606
        %1115 = vmatprep.subr.mxu0 %v603
        %1116 = vmatpush1.msra.mxu0 %v602
        %1117 = vmatprep.subr.mxu0 %v599
        %1118 = vmatpush1.msra.mxu0 %v598
        %1119 = vmatprep.subr.mxu0 %v595
        %1120 = vmatpush1.msra.mxu0 %v594
        %1121 = vmatprep.subr.mxu0 %v591
        %1122 = vmatpush1.msra.mxu0 %v590
        %1123 = vmatprep.subr.mxu0 %v587
        %1124 = vmatpush1.msra.mxu0 %v586
        %1125 = vmatprep.subr.mxu0 %v583
        %1126 = vmatpush1.msra.mxu0 %v582
        %1127 = vmatprep.subr.mxu0 %v579
        %1128 = vmatpush1.msra.mxu0 %v578
        %1129 = vmatprep.subr.mxu0 %v575
        %1130 = vmatpush1.msra.mxu0 %v574
        %1131 = vmatprep.subr.mxu0 %v571
        %1132 = vmatpush1.msra.mxu0 %v570
        %1133 = vmatprep.subr.mxu0 %v567
        %1134 = vmatpush1.msra.mxu0 %v566
        %1135 = vmatprep.subr.mxu0 %v563
        %1136 = vmatpush1.msra.mxu0 %v562
        %1137 = vmatprep.subr.mxu0 %v559
        %1138 = vmatpush1.msra.mxu0 %v558
        %1139 = vmatprep.subr.mxu0 %v555
        %1140 = vmatpush1.msra.mxu0 %v554
        %1141 = vmatprep.subr.mxu0 %v551
        %1142 = vmatpush1.msra.mxu0 %v550
        %1143 = vmatprep.subr.mxu0 %v547
        %1144 = vmatpush1.msra.mxu0 %v546
        %1145 = vmatprep.subr.mxu0 0.0
        %1146 = vmatpush2.msra.mxu0 0.0
        %1147 = vmatprep.subr.mxu0 0.0
        %1148 = vmatpush2.msra.mxu0 0.0
        %1149 = vmatprep.subr.mxu0 0.0
        %1150 = vmatpush2.msra.mxu0 0.0
        %1151 = vmatprep.subr.mxu0 0.0
        %1152 = vmatpush2.msra.mxu0 0.0
        %1153 = vmatprep.subr.mxu0 0.0
        %1154 = vmatpush2.msra.mxu0 0.0
        %1155 = vmatprep.subr.mxu0 0.0
        %1156 = vmatpush2.msra.mxu0 0.0
        %1157 = vmatprep.subr.mxu0 0.0
        %1158 = vmatpush2.msra.mxu0 0.0
        %1159 = vmatprep.subr.mxu0 0.0
        %1160 = vmatpush2.msra.mxu0 0.0
        %1161 = vmatprep.subr.mxu0 0.0
        %1162 = vmatpush2.msra.mxu0 0.0
        %1163 = vmatprep.subr.mxu0 0.0
        %1164 = vmatpush2.msra.mxu0 0.0
        %1165 = vmatprep.subr.mxu0 0.0
        %1166 = vmatpush2.msra.mxu0 0.0
        %1167 = vmatprep.subr.mxu0 0.0
        %1168 = vmatpush2.msra.mxu0 0.0
        %1169 = vmatprep.subr.mxu0 0.0
        %1170 = vmatpush2.msra.mxu0 0.0
        %1171 = vmatprep.subr.mxu0 0.0
        %1172 = vmatpush2.msra.mxu0 0.0
        %1173 = vmatprep.subr.mxu0 0.0
        %1174 = vmatpush2.msra.mxu0 0.0
        %1175 = vmatprep.subr.mxu0 0.0
        %1176 = vmatpush2.msra.mxu0 0.0
        %1177 = vmatprep.mubr.f32.mxu0 0.0
        %1178 = vmatmul.mubr.f32.gmra.mxu0 %v262
        %v1179 = vpop.f32.mrf.mxu0
        %v1180 = vadd.f32 %v1079, %v1179
        %v1181 = vpop.f32.mrf.mxu0
        %v1182 = vadd.f32 %v1081, %v1181
        %1183 = vmatprep.mubr.f32.mxu0 0.0
        %1184 = vmatmul.mubr.f32.gmra.mxu0 %v267
        %v1185 = vpop.f32.mrf.mxu0
        %v1186 = vadd.f32 %v1085, %v1185
        %v1187 = vpop.f32.mrf.mxu0
        %v1188 = vadd.f32 %v1087, %v1187
        %1189 = vmatprep.mubr.f32.mxu0 0.0
        %1190 = vmatmul.mubr.f32.gmra.mxu0 %v272
        %v1191 = vpop.f32.mrf.mxu0
        %v1192 = vadd.f32 %v1091, %v1191
        %v1193 = vpop.f32.mrf.mxu0
        %v1194 = vadd.f32 %v1093, %v1193
        %1195 = vmatprep.mubr.f32.mxu0 0.0
        %1196 = vmatmul.mubr.f32.gmra.mxu0 %v277
        %v1197 = vpop.f32.mrf.mxu0
        %v1198 = vadd.f32 %v1097, %v1197
        %v1199 = vpop.f32.mrf.mxu0
        %v1200 = vadd.f32 %v1099, %v1199
        %1201 = vmatprep.mubr.f32.mxu0 0.0
        %1202 = vmatmul.mubr.f32.gmra.mxu0 %v282
        %v1203 = vpop.f32.mrf.mxu0
        %v1204 = vadd.f32 %v1103, %v1203
        %v1205 = vpop.f32.mrf.mxu0
        %v1206 = vadd.f32 %v1105, %v1205
        %1207 = vmatprep.mubr.f32.mxu0 0.0
        %1208 = vmatmul.mubr.f32.gmra.mxu0 %v287
        %v1209 = vpop.f32.mrf.mxu0
        %v1210 = vadd.f32 %v1109, %v1209
        %v1211 = vpop.f32.mrf.mxu0
        %v1212 = vadd.f32 %v1111, %v1211
        %1213 = vdwg.mxu0
        %v1214 = vld [vmem:[#allocation7] sm:$0x1f]
        %v1216 = vlaneseq
        %v1217 = vshrl.u32 %v1216, 7
        %v1218 = vsub.s32 0, %v1217
        %v1219 = vrot.slane %v1214, %v1218
        %v1220 = vlaneseq
        %v1221 = vshrl.u32 %v1220, 7
        %v1222 = vsub.s32 1, %v1221
        %v1223 = vrot.slane %v1214, %v1222
        %v1224 = vlaneseq
        %v1225 = vshrl.u32 %v1224, 7
        %v1226 = vsub.s32 2, %v1225
        %v1227 = vrot.slane %v1214, %v1226
        %v1228 = vlaneseq
        %v1229 = vshrl.u32 %v1228, 7
        %v1230 = vsub.s32 3, %v1229
        %v1231 = vrot.slane %v1214, %v1230
        %v1232 = vlaneseq
        %v1233 = vshrl.u32 %v1232, 7
        %v1234 = vsub.s32 4, %v1233
        %v1235 = vrot.slane %v1214, %v1234
        %1241 = vmatprep.subr.mxu0 0.0
        %1242 = vmatpush1.xpose.msra.mxu0 0.0
        %1243 = vmatprep.subr.mxu0 0.0
        %1244 = vmatpush1.xpose.msra.mxu0 0.0
        %1245 = vmatprep.subr.mxu0 0.0
        %1246 = vmatpush1.xpose.msra.mxu0 0.0
        %1247 = vmatprep.subr.mxu0 0.0
        %1248 = vmatpush1.xpose.msra.mxu0 0.0
        %1249 = vmatprep.subr.mxu0 0.0
        %1250 = vmatpush1.xpose.msra.mxu0 0.0
        %1251 = vmatprep.subr.mxu0 0.0
        %1252 = vmatpush1.xpose.msra.mxu0 0.0
        %1253 = vmatprep.subr.mxu0 0.0
        %1254 = vmatpush1.xpose.msra.mxu0 0.0
        %1255 = vmatprep.subr.mxu0 0.0
        %1256 = vmatpush1.xpose.msra.mxu0 0.0
        %1257 = vmatprep.subr.mxu0 0.0
        %1258 = vmatpush1.xpose.msra.mxu0 0.0
        %1259 = vmatprep.subr.mxu0 0.0
        %1260 = vmatpush1.xpose.msra.mxu0 0.0
        %1261 = vmatprep.subr.mxu0 %v284
        %1262 = vmatpush1.xpose.msra.mxu0 %v283
        %1263 = vmatprep.subr.mxu0 %v279
        %1264 = vmatpush1.xpose.msra.mxu0 %v278
        %1265 = vmatprep.subr.mxu0 %v274
        %1266 = vmatpush1.xpose.msra.mxu0 %v273
        %1267 = vmatprep.subr.mxu0 %v269
        %1268 = vmatpush1.xpose.msra.mxu0 %v268
        %1269 = vmatprep.subr.mxu0 %v264
        %1270 = vmatpush1.xpose.msra.mxu0 %v263
        %1271 = vmatprep.subr.mxu0 %v259
        %1272 = vmatpush1.xpose.msra.mxu0 %v258
        %1273 = vmatprep.subr.mxu0 0.0
        %1274 = vmatpush2.xpose.msra.mxu0 0.0
        %1275 = vmatprep.subr.mxu0 0.0
        %1276 = vmatpush2.xpose.msra.mxu0 0.0
        %1277 = vmatprep.subr.mxu0 0.0
        %1278 = vmatpush2.xpose.msra.mxu0 0.0
        %1279 = vmatprep.subr.mxu0 0.0
        %1280 = vmatpush2.xpose.msra.mxu0 0.0
        %1281 = vmatprep.subr.mxu0 0.0
        %1282 = vmatpush2.xpose.msra.mxu0 0.0
        %1283 = vmatprep.subr.mxu0 0.0
        %1284 = vmatpush2.xpose.msra.mxu0 0.0
        %1285 = vmatprep.subr.mxu0 0.0
        %1286 = vmatpush2.xpose.msra.mxu0 0.0
        %1287 = vmatprep.subr.mxu0 0.0
        %1288 = vmatpush2.xpose.msra.mxu0 0.0
        %1289 = vmatprep.subr.mxu0 0.0
        %1290 = vmatpush2.xpose.msra.mxu0 0.0
        %1291 = vmatprep.subr.mxu0 0.0
        %1292 = vmatpush2.xpose.msra.mxu0 0.0
        %1293 = vmatprep.subr.mxu0 0.0
        %1294 = vmatpush2.xpose.msra.mxu0 0.0
        %1295 = vmatprep.subr.mxu0 0.0
        %1296 = vmatpush2.xpose.msra.mxu0 0.0
        %1297 = vmatprep.subr.mxu0 0.0
        %1298 = vmatpush2.xpose.msra.mxu0 0.0
        %1299 = vmatprep.subr.mxu0 0.0
        %1300 = vmatpush2.xpose.msra.mxu0 0.0
        %1301 = vmatprep.subr.mxu0 0.0
        %1302 = vmatpush2.xpose.msra.mxu0 0.0
        %1303 = vmatprep.subr.mxu0 0.0
        %1304 = vmatpush2.xpose.msra.mxu0 0.0
        %1305 = vmatprep.mubr.f32.mxu0 %v1223
        %1306 = vmatmul.mubr.f32.gmra.mxu0 %v1219
        %v1307 = vpop.f32.mrf.mxu0
        %v1308 = vadd.f32 0.0, %v1307
        %v1309 = vpop.f32.mrf.mxu0
        %1310 = vdwg.mxu0
        %1311 = vmatprep.subr.mxu0 0.0
        %1312 = vmatpush1.xpose.msra.mxu0 0.0
        %1313 = vmatprep.subr.mxu0 0.0
        %1314 = vmatpush1.xpose.msra.mxu0 0.0
        %1315 = vmatprep.subr.mxu0 0.0
        %1316 = vmatpush1.xpose.msra.mxu0 0.0
        %1317 = vmatprep.subr.mxu0 0.0
        %1318 = vmatpush1.xpose.msra.mxu0 0.0
        %1319 = vmatprep.subr.mxu0 0.0
        %1320 = vmatpush1.xpose.msra.mxu0 0.0
        %1321 = vmatprep.subr.mxu0 0.0
        %1322 = vmatpush1.xpose.msra.mxu0 0.0
        %1323 = vmatprep.subr.mxu0 0.0
        %1324 = vmatpush1.xpose.msra.mxu0 0.0
        %1325 = vmatprep.subr.mxu0 0.0
        %1326 = vmatpush1.xpose.msra.mxu0 0.0
        %1327 = vmatprep.subr.mxu0 0.0
        %1328 = vmatpush1.xpose.msra.mxu0 0.0
        %1329 = vmatprep.subr.mxu0 0.0
        %1330 = vmatpush1.xpose.msra.mxu0 0.0
        %1331 = vmatprep.subr.mxu0 %v286
        %1332 = vmatpush1.xpose.msra.mxu0 %v285
        %1333 = vmatprep.subr.mxu0 %v281
        %1334 = vmatpush1.xpose.msra.mxu0 %v280
        %1335 = vmatprep.subr.mxu0 %v276
        %1336 = vmatpush1.xpose.msra.mxu0 %v275
        %1337 = vmatprep.subr.mxu0 %v271
        %1338 = vmatpush1.xpose.msra.mxu0 %v270
        %1339 = vmatprep.subr.mxu0 %v266
        %1340 = vmatpush1.xpose.msra.mxu0 %v265
        %1341 = vmatprep.subr.mxu0 %v261
        %1342 = vmatpush1.xpose.msra.mxu0 %v260
        %1343 = vmatprep.subr.mxu0 0.0
        %1344 = vmatpush2.xpose.msra.mxu0 0.0
        %1345 = vmatprep.subr.mxu0 0.0
        %1346 = vmatpush2.xpose.msra.mxu0 0.0
        %1347 = vmatprep.subr.mxu0 0.0
        %1348 = vmatpush2.xpose.msra.mxu0 0.0
        %1349 = vmatprep.subr.mxu0 0.0
        %1350 = vmatpush2.xpose.msra.mxu0 0.0
        %1351 = vmatprep.subr.mxu0 0.0
        %1352 = vmatpush2.xpose.msra.mxu0 0.0
        %1353 = vmatprep.subr.mxu0 0.0
        %1354 = vmatpush2.xpose.msra.mxu0 0.0
        %1355 = vmatprep.subr.mxu0 0.0
        %1356 = vmatpush2.xpose.msra.mxu0 0.0
        %1357 = vmatprep.subr.mxu0 0.0
        %1358 = vmatpush2.xpose.msra.mxu0 0.0
        %1359 = vmatprep.subr.mxu0 0.0
        %1360 = vmatpush2.xpose.msra.mxu0 0.0
        %1361 = vmatprep.subr.mxu0 0.0
        %1362 = vmatpush2.xpose.msra.mxu0 0.0
        %1363 = vmatprep.subr.mxu0 0.0
        %1364 = vmatpush2.xpose.msra.mxu0 0.0
        %1365 = vmatprep.subr.mxu0 0.0
        %1366 = vmatpush2.xpose.msra.mxu0 0.0
        %1367 = vmatprep.subr.mxu0 0.0
        %1368 = vmatpush2.xpose.msra.mxu0 0.0
        %1369 = vmatprep.subr.mxu0 0.0
        %1370 = vmatpush2.xpose.msra.mxu0 0.0
        %1371 = vmatprep.subr.mxu0 0.0
        %1372 = vmatpush2.xpose.msra.mxu0 0.0
        %1373 = vmatprep.subr.mxu0 0.0
        %1374 = vmatpush2.xpose.msra.mxu0 0.0
        %1375 = vmatprep.mubr.f32.mxu0 %v1231
        %1376 = vmatmul.mubr.f32.gmra.mxu0 %v1227
        %v1377 = vpop.f32.mrf.mxu0
        %v1378 = vadd.f32 %v1308, %v1377
        %v1379 = vpop.f32.mrf.mxu0
        %1380 = vdwg.mxu0
        %1381 = vmatprep.subr.mxu0 0.0
        %1382 = vmatpush1.xpose.msra.mxu0 0.0
        %1383 = vmatprep.subr.mxu0 0.0
        %1384 = vmatpush1.xpose.msra.mxu0 0.0
        %1385 = vmatprep.subr.mxu0 0.0
        %1386 = vmatpush1.xpose.msra.mxu0 0.0
        %1387 = vmatprep.subr.mxu0 0.0
        %1388 = vmatpush1.xpose.msra.mxu0 0.0
        %1389 = vmatprep.subr.mxu0 0.0
        %1390 = vmatpush1.xpose.msra.mxu0 0.0
        %1391 = vmatprep.subr.mxu0 0.0
        %1392 = vmatpush1.xpose.msra.mxu0 0.0
        %1393 = vmatprep.subr.mxu0 0.0
        %1394 = vmatpush1.xpose.msra.mxu0 0.0
        %1395 = vmatprep.subr.mxu0 0.0
        %1396 = vmatpush1.xpose.msra.mxu0 0.0
        %1397 = vmatprep.subr.mxu0 0.0
        %1398 = vmatpush1.xpose.msra.mxu0 0.0
        %1399 = vmatprep.subr.mxu0 0.0
        %1400 = vmatpush1.xpose.msra.mxu0 0.0
        %1401 = vmatprep.subr.mxu0 0.0
        %1402 = vmatpush1.xpose.msra.mxu0 %v287
        %1403 = vmatprep.subr.mxu0 0.0
        %1404 = vmatpush1.xpose.msra.mxu0 %v282
        %1405 = vmatprep.subr.mxu0 0.0
        %1406 = vmatpush1.xpose.msra.mxu0 %v277
        %1407 = vmatprep.subr.mxu0 0.0
        %1408 = vmatpush1.xpose.msra.mxu0 %v272
        %1409 = vmatprep.subr.mxu0 0.0
        %1410 = vmatpush1.xpose.msra.mxu0 %v267
        %1411 = vmatprep.subr.mxu0 0.0
        %1412 = vmatpush1.xpose.msra.mxu0 %v262
        %1413 = vmatprep.subr.mxu0 0.0
        %1414 = vmatpush2.xpose.msra.mxu0 0.0
        %1415 = vmatprep.subr.mxu0 0.0
        %1416 = vmatpush2.xpose.msra.mxu0 0.0
        %1417 = vmatprep.subr.mxu0 0.0
        %1418 = vmatpush2.xpose.msra.mxu0 0.0
        %1419 = vmatprep.subr.mxu0 0.0
        %1420 = vmatpush2.xpose.msra.mxu0 0.0
        %1421 = vmatprep.subr.mxu0 0.0
        %1422 = vmatpush2.xpose.msra.mxu0 0.0
        %1423 = vmatprep.subr.mxu0 0.0
        %1424 = vmatpush2.xpose.msra.mxu0 0.0
        %1425 = vmatprep.subr.mxu0 0.0
        %1426 = vmatpush2.xpose.msra.mxu0 0.0
        %1427 = vmatprep.subr.mxu0 0.0
        %1428 = vmatpush2.xpose.msra.mxu0 0.0
        %1429 = vmatprep.subr.mxu0 0.0
        %1430 = vmatpush2.xpose.msra.mxu0 0.0
        %1431 = vmatprep.subr.mxu0 0.0
        %1432 = vmatpush2.xpose.msra.mxu0 0.0
        %1433 = vmatprep.subr.mxu0 0.0
        %1434 = vmatpush2.xpose.msra.mxu0 0.0
        %1435 = vmatprep.subr.mxu0 0.0
        %1436 = vmatpush2.xpose.msra.mxu0 0.0
        %1437 = vmatprep.subr.mxu0 0.0
        %1438 = vmatpush2.xpose.msra.mxu0 0.0
        %1439 = vmatprep.subr.mxu0 0.0
        %1440 = vmatpush2.xpose.msra.mxu0 0.0
        %1441 = vmatprep.subr.mxu0 0.0
        %1442 = vmatpush2.xpose.msra.mxu0 0.0
        %1443 = vmatprep.subr.mxu0 0.0
        %1444 = vmatpush2.xpose.msra.mxu0 0.0
        %1445 = vmatprep.mubr.f32.mxu0 0.0
        %1446 = vmatmul.mubr.f32.gmra.mxu0 %v1235
        %v1447 = vpop.f32.mrf.mxu0
        %v1448 = vadd.f32 %v1378, %v1447
        %v1449 = vpop.f32.mrf.mxu0
        %1450 = vdwg.mxu0
        %v1451 = vlaneseq
        %v1452 = vshrl.u32 %v1451, 7
        %v1453 = vlaneseq
        %v1454 = vand.u32 %v1453, 127
        %v1455 = vmul.u32 %v1452, 24
        %v1456 = vadd.s32 %v1455, 1
        %vm1457 = vcmp.ge.s32.totalorder %v1454, %v1456
        %v1458 = vadd.s32 %v1455, 17
        %vm1459 = vcmp.lt.s32.totalorder %v1454, %v1458
        %vm1460 = vmand %vm1457, %vm1459
        %v1461 = vlaneseq
        %v1462 = vshrl.u32 %v1461, 7
        %v1463 = vsub.s32 0, %v1462
        %v1464 = vrot.slane %v1448, %v1463
        %v1465 = vsel %vm1460, %v1464, -1e+30
        %vm1466 = vcmask 386048
        %v1467 = vsel %vm1466, %v1465, -inf
        %1468 = vmax.xlane.f32.xlu0 %v1467
        %v1469 = vpop.xlane.xlu0 %1468
        %v1470 = vsub.f32 %v1465, %v1469
        %v1471 = vmul.f32 %v1470, 1.442695
        %v1472 = vpow.pop %v1471
        %v1473 = vsel %vm1466, %v1472, 0.0
        %1474 = vadd.xlane.f32.xlu0 %v1473
        %v1475 = vpop.xlane.xlu0 %1474
        %v1476 = vrcp.pop %v1475
        %v1477 = vmul.f32 %v1472, %v1476
        %v1478 = vld [vmem:[#allocation8] sm:$0xf]
        %v1480 = vlaneseq
        %v1481 = vshrl.u32 %v1480, 7
        %v1482 = vsub.s32 0, %v1481
        %v1483 = vrot.slane %v1478, %v1482
        %v1484 = vlaneseq
        %v1485 = vshrl.u32 %v1484, 7
        %v1486 = vsub.s32 1, %v1485
        %v1487 = vrot.slane %v1478, %v1486
        %v1488 = vlaneseq
        %v1489 = vshrl.u32 %v1488, 7
        %v1490 = vsub.s32 2, %v1489
        %v1491 = vrot.slane %v1478, %v1490
        %v1492 = vlaneseq
        %v1493 = vshrl.u32 %v1492, 7
        %v1494 = vsub.s32 3, %v1493
        %v1495 = vrot.slane %v1478, %v1494
        %vm1500 = vcmask 392192
        %v1502 = vsel %vm1500, %v1477, 0
        %1504 = vmatprep.subr.mxu0 0.0
        %1505 = vmatpush1.msra.mxu0 0.0
        %1506 = vmatprep.subr.mxu0 0.0
        %1507 = vmatpush1.msra.mxu0 0.0
        %1508 = vmatprep.subr.mxu0 0.0
        %1509 = vmatpush1.msra.mxu0 0.0
        %1510 = vmatprep.subr.mxu0 0.0
        %1511 = vmatpush1.msra.mxu0 0.0
        %1512 = vmatprep.subr.mxu0 0.0
        %1513 = vmatpush1.msra.mxu0 0.0
        %1514 = vmatprep.subr.mxu0 0.0
        %1515 = vmatpush1.msra.mxu0 0.0
        %1516 = vmatprep.subr.mxu0 0.0
        %1517 = vmatpush1.msra.mxu0 0.0
        %1518 = vmatprep.subr.mxu0 0.0
        %1519 = vmatpush1.msra.mxu0 0.0
        %1520 = vmatprep.subr.mxu0 0.0
        %1521 = vmatpush1.msra.mxu0 0.0
        %1522 = vmatprep.subr.mxu0 0.0
        %1523 = vmatpush1.msra.mxu0 0.0
        %1524 = vmatprep.subr.mxu0 %v909
        %1525 = vmatpush1.msra.mxu0 %v907
        %1526 = vmatprep.subr.mxu0 %v903
        %1527 = vmatpush1.msra.mxu0 %v901
        %1528 = vmatprep.subr.mxu0 %v897
        %1529 = vmatpush1.msra.mxu0 %v895
        %1530 = vmatprep.subr.mxu0 %v891
        %1531 = vmatpush1.msra.mxu0 %v889
        %1532 = vmatprep.subr.mxu0 %v885
        %1533 = vmatpush1.msra.mxu0 %v883
        %1534 = vmatprep.subr.mxu0 %v879
        %1535 = vmatpush1.msra.mxu0 %v877
        %1536 = vmatprep.subr.mxu0 0.0
        %1537 = vmatpush2.msra.mxu0 0.0
        %1538 = vmatprep.subr.mxu0 0.0
        %1539 = vmatpush2.msra.mxu0 0.0
        %1540 = vmatprep.subr.mxu0 0.0
        %1541 = vmatpush2.msra.mxu0 0.0
        %1542 = vmatprep.subr.mxu0 0.0
        %1543 = vmatpush2.msra.mxu0 0.0
        %1544 = vmatprep.subr.mxu0 0.0
        %1545 = vmatpush2.msra.mxu0 0.0
        %1546 = vmatprep.subr.mxu0 0.0
        %1547 = vmatpush2.msra.mxu0 0.0
        %1548 = vmatprep.subr.mxu0 0.0
        %1549 = vmatpush2.msra.mxu0 0.0
        %1550 = vmatprep.subr.mxu0 0.0
        %1551 = vmatpush2.msra.mxu0 0.0
        %1552 = vmatprep.subr.mxu0 0.0
        %1553 = vmatpush2.msra.mxu0 0.0
        %1554 = vmatprep.subr.mxu0 0.0
        %1555 = vmatpush2.msra.mxu0 0.0
        %1556 = vmatprep.subr.mxu0 0.0
        %1557 = vmatpush2.msra.mxu0 0.0
        %1558 = vmatprep.subr.mxu0 0.0
        %1559 = vmatpush2.msra.mxu0 0.0
        %1560 = vmatprep.subr.mxu0 0.0
        %1561 = vmatpush2.msra.mxu0 0.0
        %1562 = vmatprep.subr.mxu0 0.0
        %1563 = vmatpush2.msra.mxu0 0.0
        %1564 = vmatprep.subr.mxu0 0.0
        %1565 = vmatpush2.msra.mxu0 0.0
        %1566 = vmatprep.subr.mxu0 0.0
        %1567 = vmatpush2.msra.mxu0 0.0
        %1568 = vmatprep.mubr.f32.mxu0 0.0
        %1569 = vmatmul.mubr.f32.gmra.mxu0 %v1502
        %v1570 = vpop.f32.mrf.mxu0
        %v1571 = vadd.f32 %v1483, %v1570
        %v1572 = vpop.f32.mrf.mxu0
        %v1573 = vadd.f32 %v1487, %v1572
        %1574 = vdwg.mxu0
        %1575 = vmatprep.subr.mxu0 0.0
        %1576 = vmatpush1.msra.mxu0 0.0
        %1577 = vmatprep.subr.mxu0 0.0
        %1578 = vmatpush1.msra.mxu0 0.0
        %1579 = vmatprep.subr.mxu0 0.0
        %1580 = vmatpush1.msra.mxu0 0.0
        %1581 = vmatprep.subr.mxu0 0.0
        %1582 = vmatpush1.msra.mxu0 0.0
        %1583 = vmatprep.subr.mxu0 0.0
        %1584 = vmatpush1.msra.mxu0 0.0
        %1585 = vmatprep.subr.mxu0 0.0
        %1586 = vmatpush1.msra.mxu0 0.0
        %1587 = vmatprep.subr.mxu0 0.0
        %1588 = vmatpush1.msra.mxu0 0.0
        %1589 = vmatprep.subr.mxu0 0.0
        %1590 = vmatpush1.msra.mxu0 0.0
        %1591 = vmatprep.subr.mxu0 0.0
        %1592 = vmatpush1.msra.mxu0 0.0
        %1593 = vmatprep.subr.mxu0 0.0
        %1594 = vmatpush1.msra.mxu0 0.0
        %1595 = vmatprep.subr.mxu0 %v1212
        %1596 = vmatpush1.msra.mxu0 %v1210
        %1597 = vmatprep.subr.mxu0 %v1206
        %1598 = vmatpush1.msra.mxu0 %v1204
        %1599 = vmatprep.subr.mxu0 %v1200
        %1600 = vmatpush1.msra.mxu0 %v1198
        %1601 = vmatprep.subr.mxu0 %v1194
        %1602 = vmatpush1.msra.mxu0 %v1192
        %1603 = vmatprep.subr.mxu0 %v1188
        %1604 = vmatpush1.msra.mxu0 %v1186
        %1605 = vmatprep.subr.mxu0 %v1182
        %1606 = vmatpush1.msra.mxu0 %v1180
        %1607 = vmatprep.subr.mxu0 0.0
        %1608 = vmatpush2.msra.mxu0 0.0
        %1609 = vmatprep.subr.mxu0 0.0
        %1610 = vmatpush2.msra.mxu0 0.0
        %1611 = vmatprep.subr.mxu0 0.0
        %1612 = vmatpush2.msra.mxu0 0.0
        %1613 = vmatprep.subr.mxu0 0.0
        %1614 = vmatpush2.msra.mxu0 0.0
        %1615 = vmatprep.subr.mxu0 0.0
        %1616 = vmatpush2.msra.mxu0 0.0
        %1617 = vmatprep.subr.mxu0 0.0
        %1618 = vmatpush2.msra.mxu0 0.0
        %1619 = vmatprep.subr.mxu0 0.0
        %1620 = vmatpush2.msra.mxu0 0.0
        %1621 = vmatprep.subr.mxu0 0.0
        %1622 = vmatpush2.msra.mxu0 0.0
        %1623 = vmatprep.subr.mxu0 0.0
        %1624 = vmatpush2.msra.mxu0 0.0
        %1625 = vmatprep.subr.mxu0 0.0
        %1626 = vmatpush2.msra.mxu0 0.0
        %1627 = vmatprep.subr.mxu0 0.0
        %1628 = vmatpush2.msra.mxu0 0.0
        %1629 = vmatprep.subr.mxu0 0.0
        %1630 = vmatpush2.msra.mxu0 0.0
        %1631 = vmatprep.subr.mxu0 0.0
        %1632 = vmatpush2.msra.mxu0 0.0
        %1633 = vmatprep.subr.mxu0 0.0
        %1634 = vmatpush2.msra.mxu0 0.0
        %1635 = vmatprep.subr.mxu0 0.0
        %1636 = vmatpush2.msra.mxu0 0.0
        %1637 = vmatprep.subr.mxu0 0.0
        %1638 = vmatpush2.msra.mxu0 0.0
        %1639 = vmatprep.mubr.f32.mxu0 0.0
        %1640 = vmatmul.mubr.f32.gmra.mxu0 %v1502
        %v1641 = vpop.f32.mrf.mxu0
        %v1642 = vadd.f32 %v1491, %v1641
        %v1643 = vpop.f32.mrf.mxu0
        %v1644 = vadd.f32 %v1495, %v1643
        %1645 = vdwg.mxu0
        %v1650 = vcombine.low %v1571, %v1573
        %v1651 = vcombine.low %v1642, %v1644
        %v1653 = vunpack.c.l.s4 1983009808
        %v1654 = vunpack.c.0.s8 %v1653
        %v1655 = vlaneseq
        %v1656 = vshrl.u32 %v1655, 7
        %v1657 = vsub.s32 %v1654, %v1656
        %v1658 = vrot.slane %v1650, %v1657
        %v1660 = vunpack.c.l.s4 1983009808
        %v1661 = vunpack.c.0.s8 %v1660
        %v1662 = vlaneseq
        %v1663 = vshrl.u32 %v1662, 7
        %v1664 = vsub.s32 %v1661, %v1663
        %v1665 = vrot.slane %v1651, %v1664
        %v1666 = vcombine.low %v1658, %v1665
        %1668 = vst [vmem:[%s256] sm:$0xff] %v1666
        %s1669 = sand.u32 %s120, 1
        %s1670 = scalar_lea.sflag [#allocation4], %s1669
        %s1671 = sand.u32 %s120, 1
        %s1672 = smul.addr %s1671, 8
        %s1673 = scalar_lea.vmem [#allocation10], %s1672
        // Predicated region
        $region53: #{tpu_custom_call.1} parent=35 // pred_check
          %p1674 = pneg %p130
        $region54: #{tpu_custom_call.1} parent=35 // pred_check_branch
          %1676 = sbr.rel (%p1674) target = $region56
        $region55: #{tpu_custom_call.1} parent=35 // pred_region
          %s1678 = ssub.s32 128, 128
          %1679 = vsyncadd %s1670, %s1678
          %s1680 = smul.addr %s23, 4
          %s1681 = smul.addr %s1680, 32
          %s1682 = scalar_lea.hbm %s4, %s1681
          %s1684 = sshll.u32 %s1673, 4
          %s1685 = int_to_ptr.vmem [resolvable:$true] %s1684
          %1687 = dma.vmem_to_hbm [thread:$0]  %s1685, 128, %s1682, %s1670
        $region56: #{tpu_custom_call.1} parent=35 // pred_fallthru
          _
      $region36: #{tpu_custom_call.1} parent=5 // pred_fallthru
        _
      %p1688 = scmp.le.s32.totalorder 2, %s18
      // Predicated region
      $region57: #{tpu_custom_call.1} parent=5 // pred_check
        %p1689 = pneg %p1688
      $region58: #{tpu_custom_call.1} parent=5 // pred_check_branch
        %1691 = sbr.rel (%p1689) target = $region60
      $region59: #{tpu_custom_call.1} parent=5 // pred_region
        %s1692 = ssub.s32 %s18, 2
        // Predicated region
        $region61: #{tpu_custom_call.1} parent=59 // pred_check
          %p1693 = pneg %p136
        $region62: #{tpu_custom_call.1} parent=59 // pred_check_branch
          %1695 = sbr.rel (%p1693) target = $region64
        $region63: #{tpu_custom_call.1} parent=59 // pred_region
          %s1696 = sand.u32 %s121, 1
          %s1697 = scalar_lea.sflag [#allocation4], %s1696
          %s1698 = sand.u32 %s121, 1
          %s1699 = smul.addr %s1698, 8
          %s1700 = scalar_lea.vmem [#allocation10], %s1699
          %1701 = dma.done %s1697, 128
        $region64: #{tpu_custom_call.1} parent=59 // pred_fallthru
          _
      $region60: #{tpu_custom_call.1} parent=5 // pred_fallthru
        _
    $region6: #{tpu_custom_call.1} parent=1 // loop_footer
      %s22 = sadd.s32 1, %s18
    $region7: #{tpu_custom_call.1} parent=1 // loop_footer_branch
      %17 = sbr.rel target = $region3
    $region8: #{tpu_custom_call.1} parent=1 // loop_exit
      _
    %1702 = vsyncpa [#allocation3], 1
    %s1703 = scalar_lea.sflag [#allocation3], 1
    %1704 = vsyncpa %s1703, 1
    %1705 = vsyncpa [#allocation6], 1
    %1706 = vsyncpa [#allocation9], 1
    %1707 = vsyncpa [#allocation4], 1
    %s1708 = scalar_lea.sflag [#allocation4], 1
    %1709 = vsyncpa %s1708, 1

</llo_original>
